<compile_context>
chip_gen: v5e
topology: v5e:2x2
jax: 0.10.0
libtpu: 0.0.40
codegen_flags: <defaults>
</compile_context>

<pallas_src>
import jax
import jax.numpy as jnp
from jax import lax
from jax.experimental import pallas as pl
from jax.experimental.pallas import tpu as pltpu

SUB = 8  # f32 sublane count


def make_irunit_kernel(K, H, W, CP, Nb):
    """CP: padded channel count (multiple of 8). Nb: images per grid step."""
    HW = H * W
    Ho, Wo = H - K + 1, W - K + 1
    # The flattened zero-padding trick relies on stride-1 / VALID and K-1 < W, H.
    assert 1 <= K <= min(H, W), "requires kernel_size <= min(H, W)"
    assert Ho >= 1 and Wo >= 1
    assert CP % SUB == 0

    TAPS = K * K
    ROWS = TAPS * CP + SUB  # +SUB: one all-ones bias row, rest zero padding

    # Lane-rotation shifts (non-negative, static) so rolled[col] = img[(col+s) % HW].
    shifts1 = [(-(ky * W + kx)) % HW for ky in range(K) for kx in range(K)]
    shifts2 = [(-((ky - (K - 1)) * W + (kx - (K - 1)))) % HW
               for ky in range(K) for kx in range(K)]

    def fill_taps(p_ref, img, shifts):
        # img: (CP, HW).  Write each lane-rotated copy to its 8-row-aligned slot.
        for t, sh in enumerate(shifts):
            rolled = img if sh == 0 else pltpu.roll(img, shift=sh, axis=1)
            p_ref[t * CP:(t + 1) * CP, :] = rolled

    def kernel(x_ref, wc_ref, wt_ref, mask_ref, alpha_ref, o_ref, p_ref):
        # x_ref     : (Nb, CP, HW)  flattened images, channels on sublanes (padded)
        # wc_ref    : (CP, ROWS)    conv weight, cols (ky, kx, cin) + bias col
        # wt_ref    : (CP, ROWS)    flipped/ch-swapped tconv weight + bias col
        # mask_ref  : (1, HW)       valid-output spatial mask (grid-invariant)
        # alpha_ref : (1,) SMEM     PReLU slope (single shared param)
        # o_ref     : (Nb, CP, HW)
        # p_ref     : (ROWS, HW)    im2col scratch, reused for both convs
        alpha = alpha_ref[0]
        mask = mask_ref[...]                                    # (1, HW)

        # Constant bias rows of the scratch: row TAPS*CP = 1.0, pad rows = 0.
        r = lax.broadcasted_iota(jnp.int32, (SUB, HW), 0)
        p_ref[TAPS * CP:, :] = jnp.where(r == 0, 1.0, 0.0).astype(jnp.float32)

        for b in range(Nb):                                     # unrolled
            x = x_ref[b]                                        # (CP, HW)

            # ---- Conv2d (valid) as ONE matmul, bias folded in ----
            fill_taps(p_ref, x, shifts1)
            h = jnp.dot(wc_ref[...], p_ref[...],
                        preferred_element_type=jnp.float32)     # (CP, HW)
            # Fused PReLU + validity mask (zero the non-valid conv outputs so the
            # transposed conv below sees exact zero padding, incl. wrap-around).
            h = jnp.where(h >= 0.0, h, h * alpha) * mask

            # ---- ConvTranspose2d == full conv over zero padding, ONE matmul ----
            fill_taps(p_ref, h, shifts2)
            hh = jnp.dot(wt_ref[...], p_ref[...],
                         preferred_element_type=jnp.float32)    # (CP, HW)

            o_ref[b] = x - hh                                   # residual

    return kernel, ROWS


def _images_per_step(N):
    # Amortize per-step overhead for larger N, but keep >= 2 grid steps so both
    # v7x TensorCores get work.  Must divide N.
    if N <= 2:
        return 1
    best = 1
    for d in range(1, min(8, N // 2) + 1):
        if N % d == 0:
            best = d
    return best


def irunit_forward(x_nchw, conv_w, conv_b, prelu_alpha, tconv_w, tconv_b):
    """x_nchw: (N, Cin, H, W). Weights in PyTorch layouts:
       conv_w (Cf, Cin, K, K), tconv_w (Cf, Cin, K, K) [in_ch, out_ch, kH, kW]."""
    N, Cin, H, W = x_nchw.shape
    Cf, _, K, _ = conv_w.shape
    HW = H * W
    Ho, Wo = H - K + 1, W - K + 1

    # Pad every channel dim to the same multiple of 8 (sublane count).
    CP = max(SUB, ((max(Cin, Cf) + SUB - 1) // SUB) * SUB)
    TAPS = K * K

    # ---------------- layout plumbing (plain JAX glue) ----------------
    # NCHW is already channel-major -> pure reshape + zero channel padding.
    x_flat = jnp.zeros((N, CP, HW), jnp.float32)
    x_flat = x_flat.at[:, :Cin, :].set(
        x_nchw.reshape(N, Cin, HW).astype(jnp.float32))

    # conv weight -> (CP, TAPS*CP) with columns ordered (ky, kx, cin), + bias col.
    wc_t = jnp.transpose(conv_w, (0, 2, 3, 1)).astype(jnp.float32)      # (Cf,K,K,Cin)
    wc_p = jnp.zeros((CP, K, K, CP), jnp.float32).at[:Cf, :, :, :Cin].set(wc_t)
    wc_flat = wc_p.reshape(CP, TAPS * CP)
    bc_col = jnp.zeros((CP, SUB), jnp.float32).at[:Cf, 0].set(
        conv_b.astype(jnp.float32))
    wc_ext = jnp.concatenate([wc_flat, bc_col], axis=1)                 # (CP, ROWS)

    # tconv -> full conv: flip spatially, swap in/out channels; columns (ky,kx,cf).
    wt_t = jnp.transpose(tconv_w[:, :, ::-1, ::-1], (1, 2, 3, 0)).astype(jnp.float32)
    wt_p = jnp.zeros((CP, K, K, CP), jnp.float32).at[:Cin, :, :, :Cf].set(wt_t)
    wt_flat = wt_p.reshape(CP, TAPS * CP)
    bt_col = jnp.zeros((CP, SUB), jnp.float32).at[:Cin, 0].set(
        tconv_b.astype(jnp.float32))
    wt_ext = jnp.concatenate([wt_flat, bt_col], axis=1)                 # (CP, ROWS)

    # Grid-invariant validity mask for the valid-conv output region.
    col = jnp.arange(HW)
    valid = ((col % W) < Wo) & ((col // W) < Ho)
    mask = valid.astype(jnp.float32).reshape(1, HW)

    alpha = jnp.asarray(prelu_alpha, jnp.float32).reshape(1)
    # TODO(synk): per-channel PReLU (num_parameters=C) would need a (CP,1) vector
    # instead of the SMEM scalar; the module here uses the shared-alpha default.

    nb = _images_per_step(N)
    kernel, ROWS = make_irunit_kernel(K, H, W, CP, nb)

    out = pl.pallas_call(
        kernel,
        out_shape=jax.ShapeDtypeStruct((N, CP, HW), jnp.float32),
        grid=(N // nb,),
        in_specs=[
            pl.BlockSpec((nb, CP, HW), lambda n: (n, 0, 0)),
            pl.BlockSpec((CP, ROWS), lambda n: (0, 0)),
            pl.BlockSpec((CP, ROWS), lambda n: (0, 0)),
            pl.BlockSpec((1, HW), lambda n: (0, 0)),
            pl.BlockSpec(memory_space=pltpu.MemorySpace.SMEM),
        ],
        out_specs=pl.BlockSpec((nb, CP, HW), lambda n: (n, 0, 0)),
        scratch_shapes=[pltpu.VMEM((ROWS, HW), jnp.float32)],
        compiler_params=pltpu.CompilerParams(
            dimension_semantics=("parallel",)),
    )(x_flat, wc_ext, wt_ext, mask, alpha)

    return out[:, :Cin, :].reshape(N, Cin, H, W)


def irunit_reference(x, conv_w, conv_b, prelu_alpha, tconv_w, tconv_b):
    """Pure-JAX reference (NCHW) for correctness checking."""
    K = conv_w.shape[2]
    dn = lax.conv_dimension_numbers(x.shape, conv_w.shape, ('NCHW', 'OIHW', 'NCHW'))
    htx = lax.conv_general_dilated(x, conv_w, (1, 1), 'VALID', dimension_numbers=dn)
    htx = htx + conv_b.reshape(1, -1, 1, 1)
    htx = jnp.where(htx >= 0, htx, prelu_alpha * htx)
    # ConvTranspose2d (stride 1, pad 0) == full conv with flipped, ch-swapped kernel
    wt2 = jnp.transpose(tconv_w, (1, 0, 2, 3))[:, :, ::-1, ::-1]
    dn2 = lax.conv_dimension_numbers(htx.shape, wt2.shape, ('NCHW', 'OIHW', 'NCHW'))
    hhtx = lax.conv_general_dilated(
        htx, wt2, (1, 1), [(K - 1, K - 1), (K - 1, K - 1)], dimension_numbers=dn2)
    hhtx = hhtx + tconv_b.reshape(1, -1, 1, 1)
    return x - hhtx


if __name__ == "__main__":
    N, Cin, H, W = 2, 4, 16, 16
    Cf, K = 4, 7                                 # feature_dim defaults to input_dim

    key = jax.random.PRNGKey(0)
    k1, k2, k3, k4, k5 = jax.random.split(key, 5)
    x = jax.random.normal(k1, (N, Cin, H, W), jnp.float32)
    conv_w = 0.1 * jax.random.normal(k2, (Cf, Cin, K, K), jnp.float32)
    conv_b = 0.1 * jax.random.normal(k3, (Cf,), jnp.float32)
    tconv_w = 0.1 * jax.random.normal(k4, (Cf, Cin, K, K), jnp.float32)  # (in_ch, out_ch, kH, kW)
    tconv_b = 0.1 * jax.random.normal(k5, (Cin,), jnp.float32)
    prelu_alpha = jnp.float32(0.25)              # nn.PReLU default init

    out = irunit_forward(x, conv_w, conv_b, prelu_alpha, tconv_w, tconv_b)
    out = jax.block_until_ready(out)

    ref = irunit_reference(x, conv_w, conv_b, prelu_alpha, tconv_w, tconv_b)
    assert out.shape == x.shape
    max_err = float(jnp.max(jnp.abs(out - ref)))
    assert max_err < 1e-3, f"mismatch vs reference: {max_err}"
    print("KERNEL_OK")
</pallas_src>

<mosaic_0001>
module attributes {stable_mosaic.version = 11 : i64} {
  func.func @kernel(%arg0: i32, %arg1: memref<1x8x256xf32, #tpu.memory_space<vmem>>, %arg2: memref<8x400xf32, #tpu.memory_space<vmem>>, %arg3: memref<8x400xf32, #tpu.memory_space<vmem>>, %arg4: memref<1x256xf32, #tpu.memory_space<vmem>>, %arg5: memref<1xf32, #tpu.memory_space<smem>>, %arg6: memref<1x8x256xf32, #tpu.memory_space<vmem>>, %arg7: memref<400x256xf32, #tpu.memory_space<vmem>>) attributes {dimension_semantics = [#tpu.dimension_semantics<parallel>], iteration_bounds = array<i64: 2>, scalar_prefetch = 0 : i64, scratch_operands = 1 : i64, tpu.core_type = #tpu.core_type<tc>, window_params = [{transform_indices = @transform_0, window_bounds = array<i64: 1, 8, 256>}, {pipeline_mode = #tpu.pipeline_mode<synchronous>, transform_indices = @transform_1, window_bounds = array<i64: 8, 400>}, {pipeline_mode = #tpu.pipeline_mode<synchronous>, transform_indices = @transform_2, window_bounds = array<i64: 8, 400>}, {pipeline_mode = #tpu.pipeline_mode<synchronous>, transform_indices = @transform_3, window_bounds = array<i64: 1, 256>}, {transform_indices = @transform_4, window_bounds = array<i64: 1>}, {transform_indices = @transform_5, window_bounds = array<i64: 1, 8, 256>}]} {
    %c0 = arith.constant 0 : index
    %0 = memref.load %arg5[%c0] : memref<1xf32, #tpu.memory_space<smem>>
    %c0_0 = arith.constant 0 : index
    %c0_1 = arith.constant 0 : index
    %1 = vector.load %arg4[%c0_0, %c0_1] : memref<1x256xf32, #tpu.memory_space<vmem>>, vector<1x256xf32>
    %2 = tpu.iota {dimensions = array<i32: 0>} : vector<8x256xi32>
    %c0_i32 = arith.constant 0 : i32
    %3 = vector.broadcast %c0_i32 : i32 to vector<8x256xi32>
    %4 = arith.cmpi eq, %2, %3 : vector<8x256xi32>
    %cst = arith.constant 1.000000e+00 : f32
    %cst_2 = arith.constant 0.000000e+00 : f32
    %5 = vector.broadcast %cst : f32 to vector<8x256xf32>
    %6 = vector.broadcast %cst_2 : f32 to vector<8x256xf32>
    %7 = arith.select %4, %5, %6 : vector<8x256xi1>, vector<8x256xf32>
    %c392 = arith.constant 392 : index
    %c0_3 = arith.constant 0 : index
    %8 = vector.load %arg7[%c392, %c0_3] : memref<400x256xf32, #tpu.memory_space<vmem>>, vector<8x256xf32>
    tpu.vector_store %arg7[%c392, %c0_3], %7 {strides = array<i32>} : memref<400x256xf32, #tpu.memory_space<vmem>>, vector<8x256xf32>,
    %c0_4 = arith.constant 0 : index
    %c0_5 = arith.constant 0 : index
    %c0_6 = arith.constant 0 : index
    %9 = vector.load %arg1[%c0_4, %c0_5, %c0_6] : memref<1x8x256xf32, #tpu.memory_space<vmem>>, vector<1x8x256xf32>
    %10 = vector.shape_cast %9 : vector<1x8x256xf32> to vector<8x256xf32>
    %c0_7 = arith.constant 0 : index
    %c0_8 = arith.constant 0 : index
    %11 = vector.load %arg7[%c0_7, %c0_8] : memref<400x256xf32, #tpu.memory_space<vmem>>, vector<8x256xf32>
    tpu.vector_store %arg7[%c0_7, %c0_8], %10 {strides = array<i32>} : memref<400x256xf32, #tpu.memory_space<vmem>>, vector<8x256xf32>,
    %c255_i32 = arith.constant 255 : i32
    %12 = tpu.dynamic_rotate %10 by %c255_i32 dim 1 : vector<8x256xf32>, i32 -> vector<8x256xf32>
    %c8 = arith.constant 8 : index
    %c0_9 = arith.constant 0 : index
    %13 = vector.load %arg7[%c8, %c0_9] : memref<400x256xf32, #tpu.memory_space<vmem>>, vector<8x256xf32>
    tpu.vector_store %arg7[%c8, %c0_9], %12 {strides = array<i32>} : memref<400x256xf32, #tpu.memory_space<vmem>>, vector<8x256xf32>,
    %c254_i32 = arith.constant 254 : i32
    %14 = tpu.dynamic_rotate %10 by %c254_i32 dim 1 : vector<8x256xf32>, i32 -> vector<8x256xf32>
    %c16 = arith.constant 16 : index
    %c0_10 = arith.constant 0 : index
    %15 = vector.load %arg7[%c16, %c0_10] : memref<400x256xf32, #tpu.memory_space<vmem>>, vector<8x256xf32>
    tpu.vector_store %arg7[%c16, %c0_10], %14 {strides = array<i32>} : memref<400x256xf32, #tpu.memory_space<vmem>>, vector<8x256xf32>,
    %c253_i32 = arith.constant 253 : i32
    %16 = tpu.dynamic_rotate %10 by %c253_i32 dim 1 : vector<8x256xf32>, i32 -> vector<8x256xf32>
    %c24 = arith.constant 24 : index
    %c0_11 = arith.constant 0 : index
    %17 = vector.load %arg7[%c24, %c0_11] : memref<400x256xf32, #tpu.memory_space<vmem>>, vector<8x256xf32>
    tpu.vector_store %arg7[%c24, %c0_11], %16 {strides = array<i32>} : memref<400x256xf32, #tpu.memory_space<vmem>>, vector<8x256xf32>,
    %c252_i32 = arith.constant 252 : i32
    %18 = tpu.dynamic_rotate %10 by %c252_i32 dim 1 : vector<8x256xf32>, i32 -> vector<8x256xf32>
    %c32 = arith.constant 32 : index
    %c0_12 = arith.constant 0 : index
    %19 = vector.load %arg7[%c32, %c0_12] : memref<400x256xf32, #tpu.memory_space<vmem>>, vector<8x256xf32>
    tpu.vector_store %arg7[%c32, %c0_12], %18 {strides = array<i32>} : memref<400x256xf32, #tpu.memory_space<vmem>>, vector<8x256xf32>,
    %c251_i32 = arith.constant 251 : i32
    %20 = tpu.dynamic_rotate %10 by %c251_i32 dim 1 : vector<8x256xf32>, i32 -> vector<8x256xf32>
    %c40 = arith.constant 40 : index
    %c0_13 = arith.constant 0 : index
    %21 = vector.load %arg7[%c40, %c0_13] : memref<400x256xf32, #tpu.memory_space<vmem>>, vector<8x256xf32>
    tpu.vector_store %arg7[%c40, %c0_13], %20 {strides = array<i32>} : memref<400x256xf32, #tpu.memory_space<vmem>>, vector<8x256xf32>,
    %c250_i32 = arith.constant 250 : i32
    %22 = tpu.dynamic_rotate %10 by %c250_i32 dim 1 : vector<8x256xf32>, i32 -> vector<8x256xf32>
    %c48 = arith.constant 48 : index
    %c0_14 = arith.constant 0 : index
    %23 = vector.load %arg7[%c48, %c0_14] : memref<400x256xf32, #tpu.memory_space<vmem>>, vector<8x256xf32>
    tpu.vector_store %arg7[%c48, %c0_14], %22 {strides = array<i32>} : memref<400x256xf32, #tpu.memory_space<vmem>>, vector<8x256xf32>,
    %c240_i32 = arith.constant 240 : i32
    %24 = tpu.dynamic_rotate %10 by %c240_i32 dim 1 : vector<8x256xf32>, i32 -> vector<8x256xf32>
    %c56 = arith.constant 56 : index
    %c0_15 = arith.constant 0 : index
    %25 = vector.load %arg7[%c56, %c0_15] : memref<400x256xf32, #tpu.memory_space<vmem>>, vector<8x256xf32>
    tpu.vector_store %arg7[%c56, %c0_15], %24 {strides = array<i32>} : memref<400x256xf32, #tpu.memory_space<vmem>>, vector<8x256xf32>,
    %c239_i32 = arith.constant 239 : i32
    %26 = tpu.dynamic_rotate %10 by %c239_i32 dim 1 : vector<8x256xf32>, i32 -> vector<8x256xf32>
    %c64 = arith.constant 64 : index
    %c0_16 = arith.constant 0 : index
    %27 = vector.load %arg7[%c64, %c0_16] : memref<400x256xf32, #tpu.memory_space<vmem>>, vector<8x256xf32>
    tpu.vector_store %arg7[%c64, %c0_16], %26 {strides = array<i32>} : memref<400x256xf32, #tpu.memory_space<vmem>>, vector<8x256xf32>,
    %c238_i32 = arith.constant 238 : i32
    %28 = tpu.dynamic_rotate %10 by %c238_i32 dim 1 : vector<8x256xf32>, i32 -> vector<8x256xf32>
    %c72 = arith.constant 72 : index
    %c0_17 = arith.constant 0 : index
    %29 = vector.load %arg7[%c72, %c0_17] : memref<400x256xf32, #tpu.memory_space<vmem>>, vector<8x256xf32>
    tpu.vector_store %arg7[%c72, %c0_17], %28 {strides = array<i32>} : memref<400x256xf32, #tpu.memory_space<vmem>>, vector<8x256xf32>,
    %c237_i32 = arith.constant 237 : i32
    %30 = tpu.dynamic_rotate %10 by %c237_i32 dim 1 : vector<8x256xf32>, i32 -> vector<8x256xf32>
    %c80 = arith.constant 80 : index
    %c0_18 = arith.constant 0 : index
    %31 = vector.load %arg7[%c80, %c0_18] : memref<400x256xf32, #tpu.memory_space<vmem>>, vector<8x256xf32>
    tpu.vector_store %arg7[%c80, %c0_18], %30 {strides = array<i32>} : memref<400x256xf32, #tpu.memory_space<vmem>>, vector<8x256xf32>,
    %c236_i32 = arith.constant 236 : i32
    %32 = tpu.dynamic_rotate %10 by %c236_i32 dim 1 : vector<8x256xf32>, i32 -> vector<8x256xf32>
    %c88 = arith.constant 88 : index
    %c0_19 = arith.constant 0 : index
    %33 = vector.load %arg7[%c88, %c0_19] : memref<400x256xf32, #tpu.memory_space<vmem>>, vector<8x256xf32>
    tpu.vector_store %arg7[%c88, %c0_19], %32 {strides = array<i32>} : memref<400x256xf32, #tpu.memory_space<vmem>>, vector<8x256xf32>,
    %c235_i32 = arith.constant 235 : i32
    %34 = tpu.dynamic_rotate %10 by %c235_i32 dim 1 : vector<8x256xf32>, i32 -> vector<8x256xf32>
    %c96 = arith.constant 96 : index
    %c0_20 = arith.constant 0 : index
    %35 = vector.load %arg7[%c96, %c0_20] : memref<400x256xf32, #tpu.memory_space<vmem>>, vector<8x256xf32>
    tpu.vector_store %arg7[%c96, %c0_20], %34 {strides = array<i32>} : memref<400x256xf32, #tpu.memory_space<vmem>>, vector<8x256xf32>,
    %c234_i32 = arith.constant 234 : i32
    %36 = tpu.dynamic_rotate %10 by %c234_i32 dim 1 : vector<8x256xf32>, i32 -> vector<8x256xf32>
    %c104 = arith.constant 104 : index
    %c0_21 = arith.constant 0 : index
    %37 = vector.load %arg7[%c104, %c0_21] : memref<400x256xf32, #tpu.memory_space<vmem>>, vector<8x256xf32>
    tpu.vector_store %arg7[%c104, %c0_21], %36 {strides = array<i32>} : memref<400x256xf32, #tpu.memory_space<vmem>>, vector<8x256xf32>,
    %c224_i32 = arith.constant 224 : i32
    %38 = tpu.dynamic_rotate %10 by %c224_i32 dim 1 : vector<8x256xf32>, i32 -> vector<8x256xf32>
    %c112 = arith.constant 112 : index
    %c0_22 = arith.constant 0 : index
    %39 = vector.load %arg7[%c112, %c0_22] : memref<400x256xf32, #tpu.memory_space<vmem>>, vector<8x256xf32>
    tpu.vector_store %arg7[%c112, %c0_22], %38 {strides = array<i32>} : memref<400x256xf32, #tpu.memory_space<vmem>>, vector<8x256xf32>,
    %c223_i32 = arith.constant 223 : i32
    %40 = tpu.dynamic_rotate %10 by %c223_i32 dim 1 : vector<8x256xf32>, i32 -> vector<8x256xf32>
    %c120 = arith.constant 120 : index
    %c0_23 = arith.constant 0 : index
    %41 = vector.load %arg7[%c120, %c0_23] : memref<400x256xf32, #tpu.memory_space<vmem>>, vector<8x256xf32>
    tpu.vector_store %arg7[%c120, %c0_23], %40 {strides = array<i32>} : memref<400x256xf32, #tpu.memory_space<vmem>>, vector<8x256xf32>,
    %c222_i32 = arith.constant 222 : i32
    %42 = tpu.dynamic_rotate %10 by %c222_i32 dim 1 : vector<8x256xf32>, i32 -> vector<8x256xf32>
    %c128 = arith.constant 128 : index
    %c0_24 = arith.constant 0 : index
    %43 = vector.load %arg7[%c128, %c0_24] : memref<400x256xf32, #tpu.memory_space<vmem>>, vector<8x256xf32>
    tpu.vector_store %arg7[%c128, %c0_24], %42 {strides = array<i32>} : memref<400x256xf32, #tpu.memory_space<vmem>>, vector<8x256xf32>,
    %c221_i32 = arith.constant 221 : i32
    %44 = tpu.dynamic_rotate %10 by %c221_i32 dim 1 : vector<8x256xf32>, i32 -> vector<8x256xf32>
    %c136 = arith.constant 136 : index
    %c0_25 = arith.constant 0 : index
    %45 = vector.load %arg7[%c136, %c0_25] : memref<400x256xf32, #tpu.memory_space<vmem>>, vector<8x256xf32>
    tpu.vector_store %arg7[%c136, %c0_25], %44 {strides = array<i32>} : memref<400x256xf32, #tpu.memory_space<vmem>>, vector<8x256xf32>,
    %c220_i32 = arith.constant 220 : i32
    %46 = tpu.dynamic_rotate %10 by %c220_i32 dim 1 : vector<8x256xf32>, i32 -> vector<8x256xf32>
    %c144 = arith.constant 144 : index
    %c0_26 = arith.constant 0 : index
    %47 = vector.load %arg7[%c144, %c0_26] : memref<400x256xf32, #tpu.memory_space<vmem>>, vector<8x256xf32>
    tpu.vector_store %arg7[%c144, %c0_26], %46 {strides = array<i32>} : memref<400x256xf32, #tpu.memory_space<vmem>>, vector<8x256xf32>,
    %c219_i32 = arith.constant 219 : i32
    %48 = tpu.dynamic_rotate %10 by %c219_i32 dim 1 : vector<8x256xf32>, i32 -> vector<8x256xf32>
    %c152 = arith.constant 152 : index
    %c0_27 = arith.constant 0 : index
    %49 = vector.load %arg7[%c152, %c0_27] : memref<400x256xf32, #tpu.memory_space<vmem>>, vector<8x256xf32>
    tpu.vector_store %arg7[%c152, %c0_27], %48 {strides = array<i32>} : memref<400x256xf32, #tpu.memory_space<vmem>>, vector<8x256xf32>,
    %c218_i32 = arith.constant 218 : i32
    %50 = tpu.dynamic_rotate %10 by %c218_i32 dim 1 : vector<8x256xf32>, i32 -> vector<8x256xf32>
    %c160 = arith.constant 160 : index
    %c0_28 = arith.constant 0 : index
    %51 = vector.load %arg7[%c160, %c0_28] : memref<400x256xf32, #tpu.memory_space<vmem>>, vector<8x256xf32>
    tpu.vector_store %arg7[%c160, %c0_28], %50 {strides = array<i32>} : memref<400x256xf32, #tpu.memory_space<vmem>>, vector<8x256xf32>,
    %c208_i32 = arith.constant 208 : i32
    %52 = tpu.dynamic_rotate %10 by %c208_i32 dim 1 : vector<8x256xf32>, i32 -> vector<8x256xf32>
    %c168 = arith.constant 168 : index
    %c0_29 = arith.constant 0 : index
    %53 = vector.load %arg7[%c168, %c0_29] : memref<400x256xf32, #tpu.memory_space<vmem>>, vector<8x256xf32>
    tpu.vector_store %arg7[%c168, %c0_29], %52 {strides = array<i32>} : memref<400x256xf32, #tpu.memory_space<vmem>>, vector<8x256xf32>,
    %c207_i32 = arith.constant 207 : i32
    %54 = tpu.dynamic_rotate %10 by %c207_i32 dim 1 : vector<8x256xf32>, i32 -> vector<8x256xf32>
    %c176 = arith.constant 176 : index
    %c0_30 = arith.constant 0 : index
    %55 = vector.load %arg7[%c176, %c0_30] : memref<400x256xf32, #tpu.memory_space<vmem>>, vector<8x256xf32>
    tpu.vector_store %arg7[%c176, %c0_30], %54 {strides = array<i32>} : memref<400x256xf32, #tpu.memory_space<vmem>>, vector<8x256xf32>,
    %c206_i32 = arith.constant 206 : i32
    %56 = tpu.dynamic_rotate %10 by %c206_i32 dim 1 : vector<8x256xf32>, i32 -> vector<8x256xf32>
    %c184 = arith.constant 184 : index
    %c0_31 = arith.constant 0 : index
    %57 = vector.load %arg7[%c184, %c0_31] : memref<400x256xf32, #tpu.memory_space<vmem>>, vector<8x256xf32>
    tpu.vector_store %arg7[%c184, %c0_31], %56 {strides = array<i32>} : memref<400x256xf32, #tpu.memory_space<vmem>>, vector<8x256xf32>,
    %c205_i32 = arith.constant 205 : i32
    %58 = tpu.dynamic_rotate %10 by %c205_i32 dim 1 : vector<8x256xf32>, i32 -> vector<8x256xf32>
    %c192 = arith.constant 192 : index
    %c0_32 = arith.constant 0 : index
    %59 = vector.load %arg7[%c192, %c0_32] : memref<400x256xf32, #tpu.memory_space<vmem>>, vector<8x256xf32>
    tpu.vector_store %arg7[%c192, %c0_32], %58 {strides = array<i32>} : memref<400x256xf32, #tpu.memory_space<vmem>>, vector<8x256xf32>,
    %c204_i32 = arith.constant 204 : i32
    %60 = tpu.dynamic_rotate %10 by %c204_i32 dim 1 : vector<8x256xf32>, i32 -> vector<8x256xf32>
    %c200 = arith.constant 200 : index
    %c0_33 = arith.constant 0 : index
    %61 = vector.load %arg7[%c200, %c0_33] : memref<400x256xf32, #tpu.memory_space<vmem>>, vector<8x256xf32>
    tpu.vector_store %arg7[%c200, %c0_33], %60 {strides = array<i32>} : memref<400x256xf32, #tpu.memory_space<vmem>>, vector<8x256xf32>,
    %c203_i32 = arith.constant 203 : i32
    %62 = tpu.dynamic_rotate %10 by %c203_i32 dim 1 : vector<8x256xf32>, i32 -> vector<8x256xf32>
    %c208 = arith.constant 208 : index
    %c0_34 = arith.constant 0 : index
    %63 = vector.load %arg7[%c208, %c0_34] : memref<400x256xf32, #tpu.memory_space<vmem>>, vector<8x256xf32>
    tpu.vector_store %arg7[%c208, %c0_34], %62 {strides = array<i32>} : memref<400x256xf32, #tpu.memory_space<vmem>>, vector<8x256xf32>,
    %c202_i32 = arith.constant 202 : i32
    %64 = tpu.dynamic_rotate %10 by %c202_i32 dim 1 : vector<8x256xf32>, i32 -> vector<8x256xf32>
    %c216 = arith.constant 216 : index
    %c0_35 = arith.constant 0 : index
    %65 = vector.load %arg7[%c216, %c0_35] : memref<400x256xf32, #tpu.memory_space<vmem>>, vector<8x256xf32>
    tpu.vector_store %arg7[%c216, %c0_35], %64 {strides = array<i32>} : memref<400x256xf32, #tpu.memory_space<vmem>>, vector<8x256xf32>,
    %c192_i32 = arith.constant 192 : i32
    %66 = tpu.dynamic_rotate %10 by %c192_i32 dim 1 : vector<8x256xf32>, i32 -> vector<8x256xf32>
    %c224 = arith.constant 224 : index
    %c0_36 = arith.constant 0 : index
    %67 = vector.load %arg7[%c224, %c0_36] : memref<400x256xf32, #tpu.memory_space<vmem>>, vector<8x256xf32>
    tpu.vector_store %arg7[%c224, %c0_36], %66 {strides = array<i32>} : memref<400x256xf32, #tpu.memory_space<vmem>>, vector<8x256xf32>,
    %c191_i32 = arith.constant 191 : i32
    %68 = tpu.dynamic_rotate %10 by %c191_i32 dim 1 : vector<8x256xf32>, i32 -> vector<8x256xf32>
    %c232 = arith.constant 232 : index
    %c0_37 = arith.constant 0 : index
    %69 = vector.load %arg7[%c232, %c0_37] : memref<400x256xf32, #tpu.memory_space<vmem>>, vector<8x256xf32>
    tpu.vector_store %arg7[%c232, %c0_37], %68 {strides = array<i32>} : memref<400x256xf32, #tpu.memory_space<vmem>>, vector<8x256xf32>,
    %c190_i32 = arith.constant 190 : i32
    %70 = tpu.dynamic_rotate %10 by %c190_i32 dim 1 : vector<8x256xf32>, i32 -> vector<8x256xf32>
    %c240 = arith.constant 240 : index
    %c0_38 = arith.constant 0 : index
    %71 = vector.load %arg7[%c240, %c0_38] : memref<400x256xf32, #tpu.memory_space<vmem>>, vector<8x256xf32>
    tpu.vector_store %arg7[%c240, %c0_38], %70 {strides = array<i32>} : memref<400x256xf32, #tpu.memory_space<vmem>>, vector<8x256xf32>,
    %c189_i32 = arith.constant 189 : i32
    %72 = tpu.dynamic_rotate %10 by %c189_i32 dim 1 : vector<8x256xf32>, i32 -> vector<8x256xf32>
    %c248 = arith.constant 248 : index
    %c0_39 = arith.constant 0 : index
    %73 = vector.load %arg7[%c248, %c0_39] : memref<400x256xf32, #tpu.memory_space<vmem>>, vector<8x256xf32>
    tpu.vector_store %arg7[%c248, %c0_39], %72 {strides = array<i32>} : memref<400x256xf32, #tpu.memory_space<vmem>>, vector<8x256xf32>,
    %c188_i32 = arith.constant 188 : i32
    %74 = tpu.dynamic_rotate %10 by %c188_i32 dim 1 : vector<8x256xf32>, i32 -> vector<8x256xf32>
    %c256 = arith.constant 256 : index
    %c0_40 = arith.constant 0 : index
    %75 = vector.load %arg7[%c256, %c0_40] : memref<400x256xf32, #tpu.memory_space<vmem>>, vector<8x256xf32>
    tpu.vector_store %arg7[%c256, %c0_40], %74 {strides = array<i32>} : memref<400x256xf32, #tpu.memory_space<vmem>>, vector<8x256xf32>,
    %c187_i32 = arith.constant 187 : i32
    %76 = tpu.dynamic_rotate %10 by %c187_i32 dim 1 : vector<8x256xf32>, i32 -> vector<8x256xf32>
    %c264 = arith.constant 264 : index
    %c0_41 = arith.constant 0 : index
    %77 = vector.load %arg7[%c264, %c0_41] : memref<400x256xf32, #tpu.memory_space<vmem>>, vector<8x256xf32>
    tpu.vector_store %arg7[%c264, %c0_41], %76 {strides = array<i32>} : memref<400x256xf32, #tpu.memory_space<vmem>>, vector<8x256xf32>,
    %c186_i32 = arith.constant 186 : i32
    %78 = tpu.dynamic_rotate %10 by %c186_i32 dim 1 : vector<8x256xf32>, i32 -> vector<8x256xf32>
    %c272 = arith.constant 272 : index
    %c0_42 = arith.constant 0 : index
    %79 = vector.load %arg7[%c272, %c0_42] : memref<400x256xf32, #tpu.memory_space<vmem>>, vector<8x256xf32>
    tpu.vector_store %arg7[%c272, %c0_42], %78 {strides = array<i32>} : memref<400x256xf32, #tpu.memory_space<vmem>>, vector<8x256xf32>,
    %c176_i32 = arith.constant 176 : i32
    %80 = tpu.dynamic_rotate %10 by %c176_i32 dim 1 : vector<8x256xf32>, i32 -> vector<8x256xf32>
    %c280 = arith.constant 280 : index
    %c0_43 = arith.constant 0 : index
    %81 = vector.load %arg7[%c280, %c0_43] : memref<400x256xf32, #tpu.memory_space<vmem>>, vector<8x256xf32>
    tpu.vector_store %arg7[%c280, %c0_43], %80 {strides = array<i32>} : memref<400x256xf32, #tpu.memory_space<vmem>>, vector<8x256xf32>,
    %c175_i32 = arith.constant 175 : i32
    %82 = tpu.dynamic_rotate %10 by %c175_i32 dim 1 : vector<8x256xf32>, i32 -> vector<8x256xf32>
    %c288 = arith.constant 288 : index
    %c0_44 = arith.constant 0 : index
    %83 = vector.load %arg7[%c288, %c0_44] : memref<400x256xf32, #tpu.memory_space<vmem>>, vector<8x256xf32>
    tpu.vector_store %arg7[%c288, %c0_44], %82 {strides = array<i32>} : memref<400x256xf32, #tpu.memory_space<vmem>>, vector<8x256xf32>,
    %c174_i32 = arith.constant 174 : i32
    %84 = tpu.dynamic_rotate %10 by %c174_i32 dim 1 : vector<8x256xf32>, i32 -> vector<8x256xf32>
    %c296 = arith.constant 296 : index
    %c0_45 = arith.constant 0 : index
    %85 = vector.load %arg7[%c296, %c0_45] : memref<400x256xf32, #tpu.memory_space<vmem>>, vector<8x256xf32>
    tpu.vector_store %arg7[%c296, %c0_45], %84 {strides = array<i32>} : memref<400x256xf32, #tpu.memory_space<vmem>>, vector<8x256xf32>,
    %c173_i32 = arith.constant 173 : i32
    %86 = tpu.dynamic_rotate %10 by %c173_i32 dim 1 : vector<8x256xf32>, i32 -> vector<8x256xf32>
    %c304 = arith.constant 304 : index
    %c0_46 = arith.constant 0 : index
    %87 = vector.load %arg7[%c304, %c0_46] : memref<400x256xf32, #tpu.memory_space<vmem>>, vector<8x256xf32>
    tpu.vector_store %arg7[%c304, %c0_46], %86 {strides = array<i32>} : memref<400x256xf32, #tpu.memory_space<vmem>>, vector<8x256xf32>,
    %c172_i32 = arith.constant 172 : i32
    %88 = tpu.dynamic_rotate %10 by %c172_i32 dim 1 : vector<8x256xf32>, i32 -> vector<8x256xf32>
    %c312 = arith.constant 312 : index
    %c0_47 = arith.constant 0 : index
    %89 = vector.load %arg7[%c312, %c0_47] : memref<400x256xf32, #tpu.memory_space<vmem>>, vector<8x256xf32>
    tpu.vector_store %arg7[%c312, %c0_47], %88 {strides = array<i32>} : memref<400x256xf32, #tpu.memory_space<vmem>>, vector<8x256xf32>,
    %c171_i32 = arith.constant 171 : i32
    %90 = tpu.dynamic_rotate %10 by %c171_i32 dim 1 : vector<8x256xf32>, i32 -> vector<8x256xf32>
    %c320 = arith.constant 320 : index
    %c0_48 = arith.constant 0 : index
    %91 = vector.load %arg7[%c320, %c0_48] : memref<400x256xf32, #tpu.memory_space<vmem>>, vector<8x256xf32>
    tpu.vector_store %arg7[%c320, %c0_48], %90 {strides = array<i32>} : memref<400x256xf32, #tpu.memory_space<vmem>>, vector<8x256xf32>,
    %c170_i32 = arith.constant 170 : i32
    %92 = tpu.dynamic_rotate %10 by %c170_i32 dim 1 : vector<8x256xf32>, i32 -> vector<8x256xf32>
    %c328 = arith.constant 328 : index
    %c0_49 = arith.constant 0 : index
    %93 = vector.load %arg7[%c328, %c0_49] : memref<400x256xf32, #tpu.memory_space<vmem>>, vector<8x256xf32>
    tpu.vector_store %arg7[%c328, %c0_49], %92 {strides = array<i32>} : memref<400x256xf32, #tpu.memory_space<vmem>>, vector<8x256xf32>,
    %c160_i32 = arith.constant 160 : i32
    %94 = tpu.dynamic_rotate %10 by %c160_i32 dim 1 : vector<8x256xf32>, i32 -> vector<8x256xf32>
    %c336 = arith.constant 336 : index
    %c0_50 = arith.constant 0 : index
    %95 = vector.load %arg7[%c336, %c0_50] : memref<400x256xf32, #tpu.memory_space<vmem>>, vector<8x256xf32>
    tpu.vector_store %arg7[%c336, %c0_50], %94 {strides = array<i32>} : memref<400x256xf32, #tpu.memory_space<vmem>>, vector<8x256xf32>,
    %c159_i32 = arith.constant 159 : i32
    %96 = tpu.dynamic_rotate %10 by %c159_i32 dim 1 : vector<8x256xf32>, i32 -> vector<8x256xf32>
    %c344 = arith.constant 344 : index
    %c0_51 = arith.constant 0 : index
    %97 = vector.load %arg7[%c344, %c0_51] : memref<400x256xf32, #tpu.memory_space<vmem>>, vector<8x256xf32>
    tpu.vector_store %arg7[%c344, %c0_51], %96 {strides = array<i32>} : memref<400x256xf32, #tpu.memory_space<vmem>>, vector<8x256xf32>,
    %c158_i32 = arith.constant 158 : i32
    %98 = tpu.dynamic_rotate %10 by %c158_i32 dim 1 : vector<8x256xf32>, i32 -> vector<8x256xf32>
    %c352 = arith.constant 352 : index
    %c0_52 = arith.constant 0 : index
    %99 = vector.load %arg7[%c352, %c0_52] : memref<400x256xf32, #tpu.memory_space<vmem>>, vector<8x256xf32>
    tpu.vector_store %arg7[%c352, %c0_52], %98 {strides = array<i32>} : memref<400x256xf32, #tpu.memory_space<vmem>>, vector<8x256xf32>,
    %c157_i32 = arith.constant 157 : i32
    %100 = tpu.dynamic_rotate %10 by %c157_i32 dim 1 : vector<8x256xf32>, i32 -> vector<8x256xf32>
    %c360 = arith.constant 360 : index
    %c0_53 = arith.constant 0 : index
    %101 = vector.load %arg7[%c360, %c0_53] : memref<400x256xf32, #tpu.memory_space<vmem>>, vector<8x256xf32>
    tpu.vector_store %arg7[%c360, %c0_53], %100 {strides = array<i32>} : memref<400x256xf32, #tpu.memory_space<vmem>>, vector<8x256xf32>,
    %c156_i32 = arith.constant 156 : i32
    %102 = tpu.dynamic_rotate %10 by %c156_i32 dim 1 : vector<8x256xf32>, i32 -> vector<8x256xf32>
    %c368 = arith.constant 368 : index
    %c0_54 = arith.constant 0 : index
    %103 = vector.load %arg7[%c368, %c0_54] : memref<400x256xf32, #tpu.memory_space<vmem>>, vector<8x256xf32>
    tpu.vector_store %arg7[%c368, %c0_54], %102 {strides = array<i32>} : memref<400x256xf32, #tpu.memory_space<vmem>>, vector<8x256xf32>,
    %c155_i32 = arith.constant 155 : i32
    %104 = tpu.dynamic_rotate %10 by %c155_i32 dim 1 : vector<8x256xf32>, i32 -> vector<8x256xf32>
    %c376 = arith.constant 376 : index
    %c0_55 = arith.constant 0 : index
    %105 = vector.load %arg7[%c376, %c0_55] : memref<400x256xf32, #tpu.memory_space<vmem>>, vector<8x256xf32>
    tpu.vector_store %arg7[%c376, %c0_55], %104 {strides = array<i32>} : memref<400x256xf32, #tpu.memory_space<vmem>>, vector<8x256xf32>,
    %c154_i32 = arith.constant 154 : i32
    %106 = tpu.dynamic_rotate %10 by %c154_i32 dim 1 : vector<8x256xf32>, i32 -> vector<8x256xf32>
    %c384 = arith.constant 384 : index
    %c0_56 = arith.constant 0 : index
    %107 = vector.load %arg7[%c384, %c0_56] : memref<400x256xf32, #tpu.memory_space<vmem>>, vector<8x256xf32>
    tpu.vector_store %arg7[%c384, %c0_56], %106 {strides = array<i32>} : memref<400x256xf32, #tpu.memory_space<vmem>>, vector<8x256xf32>,
    %c0_57 = arith.constant 0 : index
    %c0_58 = arith.constant 0 : index
    %108 = vector.load %arg2[%c0_57, %c0_58] : memref<8x400xf32, #tpu.memory_space<vmem>>, vector<8x400xf32>
    %c0_59 = arith.constant 0 : index
    %c0_60 = arith.constant 0 : index
    %109 = vector.load %arg7[%c0_59, %c0_60] : memref<400x256xf32, #tpu.memory_space<vmem>>, vector<400x256xf32>
    %cst_61 = arith.constant dense<0.000000e+00> : vector<8x256xf32>
    %110 = tpu.matmul %108, %109, %cst_61 {dimension_numbers = #tpu.dot_dimension_numbers<[1], [0], [0], [1], [0, 0, 1, 1], [], []>} : vector<8x400xf32>, vector<400x256xf32>, vector<8x256xf32> -> vector<8x256xf32>
    %cst_62 = arith.constant 0.000000e+00 : f32
    %111 = vector.broadcast %cst_62 : f32 to vector<8x256xf32>
    %112 = arith.cmpf oge, %110, %111 : vector<8x256xf32>
    %113 = vector.broadcast %0 : f32 to vector<8x256xf32>
    %114 = arith.mulf %110, %113 : vector<8x256xf32>
    %115 = arith.select %112, %110, %114 : vector<8x256xi1>, vector<8x256xf32>
    %116 = vector.broadcast %1 : vector<1x256xf32> to vector<8x256xf32>
    %117 = arith.mulf %115, %116 : vector<8x256xf32>
    %c102_i32 = arith.constant 102 : i32
    %118 = tpu.dynamic_rotate %117 by %c102_i32 dim 1 : vector<8x256xf32>, i32 -> vector<8x256xf32>
    %c0_63 = arith.constant 0 : index
    %c0_64 = arith.constant 0 : index
    %119 = vector.load %arg7[%c0_63, %c0_64] : memref<400x256xf32, #tpu.memory_space<vmem>>, vector<8x256xf32>
    tpu.vector_store %arg7[%c0_63, %c0_64], %118 {strides = array<i32>} : memref<400x256xf32, #tpu.memory_space<vmem>>, vector<8x256xf32>,
    %c101_i32 = arith.constant 101 : i32
    %120 = tpu.dynamic_rotate %117 by %c101_i32 dim 1 : vector<8x256xf32>, i32 -> vector<8x256xf32>
    %c8_65 = arith.constant 8 : index
    %c0_66 = arith.constant 0 : index
    %121 = vector.load %arg7[%c8_65, %c0_66] : memref<400x256xf32, #tpu.memory_space<vmem>>, vector<8x256xf32>
    tpu.vector_store %arg7[%c8_65, %c0_66], %120 {strides = array<i32>} : memref<400x256xf32, #tpu.memory_space<vmem>>, vector<8x256xf32>,
    %c100_i32 = arith.constant 100 : i32
    %122 = tpu.dynamic_rotate %117 by %c100_i32 dim 1 : vector<8x256xf32>, i32 -> vector<8x256xf32>
    %c16_67 = arith.constant 16 : index
    %c0_68 = arith.constant 0 : index
    %123 = vector.load %arg7[%c16_67, %c0_68] : memref<400x256xf32, #tpu.memory_space<vmem>>, vector<8x256xf32>
    tpu.vector_store %arg7[%c16_67, %c0_68], %122 {strides = array<i32>} : memref<400x256xf32, #tpu.memory_space<vmem>>, vector<8x256xf32>,
    %c99_i32 = arith.constant 99 : i32
    %124 = tpu.dynamic_rotate %117 by %c99_i32 dim 1 : vector<8x256xf32>, i32 -> vector<8x256xf32>
    %c24_69 = arith.constant 24 : index
    %c0_70 = arith.constant 0 : index
    %125 = vector.load %arg7[%c24_69, %c0_70] : memref<400x256xf32, #tpu.memory_space<vmem>>, vector<8x256xf32>
    tpu.vector_store %arg7[%c24_69, %c0_70], %124 {strides = array<i32>} : memref<400x256xf32, #tpu.memory_space<vmem>>, vector<8x256xf32>,
    %c98_i32 = arith.constant 98 : i32
    %126 = tpu.dynamic_rotate %117 by %c98_i32 dim 1 : vector<8x256xf32>, i32 -> vector<8x256xf32>
    %c32_71 = arith.constant 32 : index
    %c0_72 = arith.constant 0 : index
    %127 = vector.load %arg7[%c32_71, %c0_72] : memref<400x256xf32, #tpu.memory_space<vmem>>, vector<8x256xf32>
    tpu.vector_store %arg7[%c32_71, %c0_72], %126 {strides = array<i32>} : memref<400x256xf32, #tpu.memory_space<vmem>>, vector<8x256xf32>,
    %c97_i32 = arith.constant 97 : i32
    %128 = tpu.dynamic_rotate %117 by %c97_i32 dim 1 : vector<8x256xf32>, i32 -> vector<8x256xf32>
    %c40_73 = arith.constant 40 : index
    %c0_74 = arith.constant 0 : index
    %129 = vector.load %arg7[%c40_73, %c0_74] : memref<400x256xf32, #tpu.memory_space<vmem>>, vector<8x256xf32>
    tpu.vector_store %arg7[%c40_73, %c0_74], %128 {strides = array<i32>} : memref<400x256xf32, #tpu.memory_space<vmem>>, vector<8x256xf32>,
    %c96_i32 = arith.constant 96 : i32
    %130 = tpu.dynamic_rotate %117 by %c96_i32 dim 1 : vector<8x256xf32>, i32 -> vector<8x256xf32>
    %c48_75 = arith.constant 48 : index
    %c0_76 = arith.constant 0 : index
    %131 = vector.load %arg7[%c48_75, %c0_76] : memref<400x256xf32, #tpu.memory_space<vmem>>, vector<8x256xf32>
    tpu.vector_store %arg7[%c48_75, %c0_76], %130 {strides = array<i32>} : memref<400x256xf32, #tpu.memory_space<vmem>>, vector<8x256xf32>,
    %c86_i32 = arith.constant 86 : i32
    %132 = tpu.dynamic_rotate %117 by %c86_i32 dim 1 : vector<8x256xf32>, i32 -> vector<8x256xf32>
    %c56_77 = arith.constant 56 : index
    %c0_78 = arith.constant 0 : index
    %133 = vector.load %arg7[%c56_77, %c0_78] : memref<400x256xf32, #tpu.memory_space<vmem>>, vector<8x256xf32>
    tpu.vector_store %arg7[%c56_77, %c0_78], %132 {strides = array<i32>} : memref<400x256xf32, #tpu.memory_space<vmem>>, vector<8x256xf32>,
    %c85_i32 = arith.constant 85 : i32
    %134 = tpu.dynamic_rotate %117 by %c85_i32 dim 1 : vector<8x256xf32>, i32 -> vector<8x256xf32>
    %c64_79 = arith.constant 64 : index
    %c0_80 = arith.constant 0 : index
    %135 = vector.load %arg7[%c64_79, %c0_80] : memref<400x256xf32, #tpu.memory_space<vmem>>, vector<8x256xf32>
    tpu.vector_store %arg7[%c64_79, %c0_80], %134 {strides = array<i32>} : memref<400x256xf32, #tpu.memory_space<vmem>>, vector<8x256xf32>,
    %c84_i32 = arith.constant 84 : i32
    %136 = tpu.dynamic_rotate %117 by %c84_i32 dim 1 : vector<8x256xf32>, i32 -> vector<8x256xf32>
    %c72_81 = arith.constant 72 : index
    %c0_82 = arith.constant 0 : index
    %137 = vector.load %arg7[%c72_81, %c0_82] : memref<400x256xf32, #tpu.memory_space<vmem>>, vector<8x256xf32>
    tpu.vector_store %arg7[%c72_81, %c0_82], %136 {strides = array<i32>} : memref<400x256xf32, #tpu.memory_space<vmem>>, vector<8x256xf32>,
    %c83_i32 = arith.constant 83 : i32
    %138 = tpu.dynamic_rotate %117 by %c83_i32 dim 1 : vector<8x256xf32>, i32 -> vector<8x256xf32>
    %c80_83 = arith.constant 80 : index
    %c0_84 = arith.constant 0 : index
    %139 = vector.load %arg7[%c80_83, %c0_84] : memref<400x256xf32, #tpu.memory_space<vmem>>, vector<8x256xf32>
    tpu.vector_store %arg7[%c80_83, %c0_84], %138 {strides = array<i32>} : memref<400x256xf32, #tpu.memory_space<vmem>>, vector<8x256xf32>,
    %c82_i32 = arith.constant 82 : i32
    %140 = tpu.dynamic_rotate %117 by %c82_i32 dim 1 : vector<8x256xf32>, i32 -> vector<8x256xf32>
    %c88_85 = arith.constant 88 : index
    %c0_86 = arith.constant 0 : index
    %141 = vector.load %arg7[%c88_85, %c0_86] : memref<400x256xf32, #tpu.memory_space<vmem>>, vector<8x256xf32>
    tpu.vector_store %arg7[%c88_85, %c0_86], %140 {strides = array<i32>} : memref<400x256xf32, #tpu.memory_space<vmem>>, vector<8x256xf32>,
    %c81_i32 = arith.constant 81 : i32
    %142 = tpu.dynamic_rotate %117 by %c81_i32 dim 1 : vector<8x256xf32>, i32 -> vector<8x256xf32>
    %c96_87 = arith.constant 96 : index
    %c0_88 = arith.constant 0 : index
    %143 = vector.load %arg7[%c96_87, %c0_88] : memref<400x256xf32, #tpu.memory_space<vmem>>, vector<8x256xf32>
    tpu.vector_store %arg7[%c96_87, %c0_88], %142 {strides = array<i32>} : memref<400x256xf32, #tpu.memory_space<vmem>>, vector<8x256xf32>,
    %c80_i32 = arith.constant 80 : i32
    %144 = tpu.dynamic_rotate %117 by %c80_i32 dim 1 : vector<8x256xf32>, i32 -> vector<8x256xf32>
    %c104_89 = arith.constant 104 : index
    %c0_90 = arith.constant 0 : index
    %145 = vector.load %arg7[%c104_89, %c0_90] : memref<400x256xf32, #tpu.memory_space<vmem>>, vector<8x256xf32>
    tpu.vector_store %arg7[%c104_89, %c0_90], %144 {strides = array<i32>} : memref<400x256xf32, #tpu.memory_space<vmem>>, vector<8x256xf32>,
    %c70_i32 = arith.constant 70 : i32
    %146 = tpu.dynamic_rotate %117 by %c70_i32 dim 1 : vector<8x256xf32>, i32 -> vector<8x256xf32>
    %c112_91 = arith.constant 112 : index
    %c0_92 = arith.constant 0 : index
    %147 = vector.load %arg7[%c112_91, %c0_92] : memref<400x256xf32, #tpu.memory_space<vmem>>, vector<8x256xf32>
    tpu.vector_store %arg7[%c112_91, %c0_92], %146 {strides = array<i32>} : memref<400x256xf32, #tpu.memory_space<vmem>>, vector<8x256xf32>,
    %c69_i32 = arith.constant 69 : i32
    %148 = tpu.dynamic_rotate %117 by %c69_i32 dim 1 : vector<8x256xf32>, i32 -> vector<8x256xf32>
    %c120_93 = arith.constant 120 : index
    %c0_94 = arith.constant 0 : index
    %149 = vector.load %arg7[%c120_93, %c0_94] : memref<400x256xf32, #tpu.memory_space<vmem>>, vector<8x256xf32>
    tpu.vector_store %arg7[%c120_93, %c0_94], %148 {strides = array<i32>} : memref<400x256xf32, #tpu.memory_space<vmem>>, vector<8x256xf32>,
    %c68_i32 = arith.constant 68 : i32
    %150 = tpu.dynamic_rotate %117 by %c68_i32 dim 1 : vector<8x256xf32>, i32 -> vector<8x256xf32>
    %c128_95 = arith.constant 128 : index
    %c0_96 = arith.constant 0 : index
    %151 = vector.load %arg7[%c128_95, %c0_96] : memref<400x256xf32, #tpu.memory_space<vmem>>, vector<8x256xf32>
    tpu.vector_store %arg7[%c128_95, %c0_96], %150 {strides = array<i32>} : memref<400x256xf32, #tpu.memory_space<vmem>>, vector<8x256xf32>,
    %c67_i32 = arith.constant 67 : i32
    %152 = tpu.dynamic_rotate %117 by %c67_i32 dim 1 : vector<8x256xf32>, i32 -> vector<8x256xf32>
    %c136_97 = arith.constant 136 : index
    %c0_98 = arith.constant 0 : index
    %153 = vector.load %arg7[%c136_97, %c0_98] : memref<400x256xf32, #tpu.memory_space<vmem>>, vector<8x256xf32>
    tpu.vector_store %arg7[%c136_97, %c0_98], %152 {strides = array<i32>} : memref<400x256xf32, #tpu.memory_space<vmem>>, vector<8x256xf32>,
    %c66_i32 = arith.constant 66 : i32
    %154 = tpu.dynamic_rotate %117 by %c66_i32 dim 1 : vector<8x256xf32>, i32 -> vector<8x256xf32>
    %c144_99 = arith.constant 144 : index
    %c0_100 = arith.constant 0 : index
    %155 = vector.load %arg7[%c144_99, %c0_100] : memref<400x256xf32, #tpu.memory_space<vmem>>, vector<8x256xf32>
    tpu.vector_store %arg7[%c144_99, %c0_100], %154 {strides = array<i32>} : memref<400x256xf32, #tpu.memory_space<vmem>>, vector<8x256xf32>,
    %c65_i32 = arith.constant 65 : i32
    %156 = tpu.dynamic_rotate %117 by %c65_i32 dim 1 : vector<8x256xf32>, i32 -> vector<8x256xf32>
    %c152_101 = arith.constant 152 : index
    %c0_102 = arith.constant 0 : index
    %157 = vector.load %arg7[%c152_101, %c0_102] : memref<400x256xf32, #tpu.memory_space<vmem>>, vector<8x256xf32>
    tpu.vector_store %arg7[%c152_101, %c0_102], %156 {strides = array<i32>} : memref<400x256xf32, #tpu.memory_space<vmem>>, vector<8x256xf32>,
    %c64_i32 = arith.constant 64 : i32
    %158 = tpu.dynamic_rotate %117 by %c64_i32 dim 1 : vector<8x256xf32>, i32 -> vector<8x256xf32>
    %c160_103 = arith.constant 160 : index
    %c0_104 = arith.constant 0 : index
    %159 = vector.load %arg7[%c160_103, %c0_104] : memref<400x256xf32, #tpu.memory_space<vmem>>, vector<8x256xf32>
    tpu.vector_store %arg7[%c160_103, %c0_104], %158 {strides = array<i32>} : memref<400x256xf32, #tpu.memory_space<vmem>>, vector<8x256xf32>,
    %c54_i32 = arith.constant 54 : i32
    %160 = tpu.dynamic_rotate %117 by %c54_i32 dim 1 : vector<8x256xf32>, i32 -> vector<8x256xf32>
    %c168_105 = arith.constant 168 : index
    %c0_106 = arith.constant 0 : index
    %161 = vector.load %arg7[%c168_105, %c0_106] : memref<400x256xf32, #tpu.memory_space<vmem>>, vector<8x256xf32>
    tpu.vector_store %arg7[%c168_105, %c0_106], %160 {strides = array<i32>} : memref<400x256xf32, #tpu.memory_space<vmem>>, vector<8x256xf32>,
    %c53_i32 = arith.constant 53 : i32
    %162 = tpu.dynamic_rotate %117 by %c53_i32 dim 1 : vector<8x256xf32>, i32 -> vector<8x256xf32>
    %c176_107 = arith.constant 176 : index
    %c0_108 = arith.constant 0 : index
    %163 = vector.load %arg7[%c176_107, %c0_108] : memref<400x256xf32, #tpu.memory_space<vmem>>, vector<8x256xf32>
    tpu.vector_store %arg7[%c176_107, %c0_108], %162 {strides = array<i32>} : memref<400x256xf32, #tpu.memory_space<vmem>>, vector<8x256xf32>,
    %c52_i32 = arith.constant 52 : i32
    %164 = tpu.dynamic_rotate %117 by %c52_i32 dim 1 : vector<8x256xf32>, i32 -> vector<8x256xf32>
    %c184_109 = arith.constant 184 : index
    %c0_110 = arith.constant 0 : index
    %165 = vector.load %arg7[%c184_109, %c0_110] : memref<400x256xf32, #tpu.memory_space<vmem>>, vector<8x256xf32>
    tpu.vector_store %arg7[%c184_109, %c0_110], %164 {strides = array<i32>} : memref<400x256xf32, #tpu.memory_space<vmem>>, vector<8x256xf32>,
    %c51_i32 = arith.constant 51 : i32
    %166 = tpu.dynamic_rotate %117 by %c51_i32 dim 1 : vector<8x256xf32>, i32 -> vector<8x256xf32>
    %c192_111 = arith.constant 192 : index
    %c0_112 = arith.constant 0 : index
    %167 = vector.load %arg7[%c192_111, %c0_112] : memref<400x256xf32, #tpu.memory_space<vmem>>, vector<8x256xf32>
    tpu.vector_store %arg7[%c192_111, %c0_112], %166 {strides = array<i32>} : memref<400x256xf32, #tpu.memory_space<vmem>>, vector<8x256xf32>,
    %c50_i32 = arith.constant 50 : i32
    %168 = tpu.dynamic_rotate %117 by %c50_i32 dim 1 : vector<8x256xf32>, i32 -> vector<8x256xf32>
    %c200_113 = arith.constant 200 : index
    %c0_114 = arith.constant 0 : index
    %169 = vector.load %arg7[%c200_113, %c0_114] : memref<400x256xf32, #tpu.memory_space<vmem>>, vector<8x256xf32>
    tpu.vector_store %arg7[%c200_113, %c0_114], %168 {strides = array<i32>} : memref<400x256xf32, #tpu.memory_space<vmem>>, vector<8x256xf32>,
    %c49_i32 = arith.constant 49 : i32
    %170 = tpu.dynamic_rotate %117 by %c49_i32 dim 1 : vector<8x256xf32>, i32 -> vector<8x256xf32>
    %c208_115 = arith.constant 208 : index
    %c0_116 = arith.constant 0 : index
    %171 = vector.load %arg7[%c208_115, %c0_116] : memref<400x256xf32, #tpu.memory_space<vmem>>, vector<8x256xf32>
    tpu.vector_store %arg7[%c208_115, %c0_116], %170 {strides = array<i32>} : memref<400x256xf32, #tpu.memory_space<vmem>>, vector<8x256xf32>,
    %c48_i32 = arith.constant 48 : i32
    %172 = tpu.dynamic_rotate %117 by %c48_i32 dim 1 : vector<8x256xf32>, i32 -> vector<8x256xf32>
    %c216_117 = arith.constant 216 : index
    %c0_118 = arith.constant 0 : index
    %173 = vector.load %arg7[%c216_117, %c0_118] : memref<400x256xf32, #tpu.memory_space<vmem>>, vector<8x256xf32>
    tpu.vector_store %arg7[%c216_117, %c0_118], %172 {strides = array<i32>} : memref<400x256xf32, #tpu.memory_space<vmem>>, vector<8x256xf32>,
    %c38_i32 = arith.constant 38 : i32
    %174 = tpu.dynamic_rotate %117 by %c38_i32 dim 1 : vector<8x256xf32>, i32 -> vector<8x256xf32>
    %c224_119 = arith.constant 224 : index
    %c0_120 = arith.constant 0 : index
    %175 = vector.load %arg7[%c224_119, %c0_120] : memref<400x256xf32, #tpu.memory_space<vmem>>, vector<8x256xf32>
    tpu.vector_store %arg7[%c224_119, %c0_120], %174 {strides = array<i32>} : memref<400x256xf32, #tpu.memory_space<vmem>>, vector<8x256xf32>,
    %c37_i32 = arith.constant 37 : i32
    %176 = tpu.dynamic_rotate %117 by %c37_i32 dim 1 : vector<8x256xf32>, i32 -> vector<8x256xf32>
    %c232_121 = arith.constant 232 : index
    %c0_122 = arith.constant 0 : index
    %177 = vector.load %arg7[%c232_121, %c0_122] : memref<400x256xf32, #tpu.memory_space<vmem>>, vector<8x256xf32>
    tpu.vector_store %arg7[%c232_121, %c0_122], %176 {strides = array<i32>} : memref<400x256xf32, #tpu.memory_space<vmem>>, vector<8x256xf32>,
    %c36_i32 = arith.constant 36 : i32
    %178 = tpu.dynamic_rotate %117 by %c36_i32 dim 1 : vector<8x256xf32>, i32 -> vector<8x256xf32>
    %c240_123 = arith.constant 240 : index
    %c0_124 = arith.constant 0 : index
    %179 = vector.load %arg7[%c240_123, %c0_124] : memref<400x256xf32, #tpu.memory_space<vmem>>, vector<8x256xf32>
    tpu.vector_store %arg7[%c240_123, %c0_124], %178 {strides = array<i32>} : memref<400x256xf32, #tpu.memory_space<vmem>>, vector<8x256xf32>,
    %c35_i32 = arith.constant 35 : i32
    %180 = tpu.dynamic_rotate %117 by %c35_i32 dim 1 : vector<8x256xf32>, i32 -> vector<8x256xf32>
    %c248_125 = arith.constant 248 : index
    %c0_126 = arith.constant 0 : index
    %181 = vector.load %arg7[%c248_125, %c0_126] : memref<400x256xf32, #tpu.memory_space<vmem>>, vector<8x256xf32>
    tpu.vector_store %arg7[%c248_125, %c0_126], %180 {strides = array<i32>} : memref<400x256xf32, #tpu.memory_space<vmem>>, vector<8x256xf32>,
    %c34_i32 = arith.constant 34 : i32
    %182 = tpu.dynamic_rotate %117 by %c34_i32 dim 1 : vector<8x256xf32>, i32 -> vector<8x256xf32>
    %c256_127 = arith.constant 256 : index
    %c0_128 = arith.constant 0 : index
    %183 = vector.load %arg7[%c256_127, %c0_128] : memref<400x256xf32, #tpu.memory_space<vmem>>, vector<8x256xf32>
    tpu.vector_store %arg7[%c256_127, %c0_128], %182 {strides = array<i32>} : memref<400x256xf32, #tpu.memory_space<vmem>>, vector<8x256xf32>,
    %c33_i32 = arith.constant 33 : i32
    %184 = tpu.dynamic_rotate %117 by %c33_i32 dim 1 : vector<8x256xf32>, i32 -> vector<8x256xf32>
    %c264_129 = arith.constant 264 : index
    %c0_130 = arith.constant 0 : index
    %185 = vector.load %arg7[%c264_129, %c0_130] : memref<400x256xf32, #tpu.memory_space<vmem>>, vector<8x256xf32>
    tpu.vector_store %arg7[%c264_129, %c0_130], %184 {strides = array<i32>} : memref<400x256xf32, #tpu.memory_space<vmem>>, vector<8x256xf32>,
    %c32_i32 = arith.constant 32 : i32
    %186 = tpu.dynamic_rotate %117 by %c32_i32 dim 1 : vector<8x256xf32>, i32 -> vector<8x256xf32>
    %c272_131 = arith.constant 272 : index
    %c0_132 = arith.constant 0 : index
    %187 = vector.load %arg7[%c272_131, %c0_132] : memref<400x256xf32, #tpu.memory_space<vmem>>, vector<8x256xf32>
    tpu.vector_store %arg7[%c272_131, %c0_132], %186 {strides = array<i32>} : memref<400x256xf32, #tpu.memory_space<vmem>>, vector<8x256xf32>,
    %c22_i32 = arith.constant 22 : i32
    %188 = tpu.dynamic_rotate %117 by %c22_i32 dim 1 : vector<8x256xf32>, i32 -> vector<8x256xf32>
    %c280_133 = arith.constant 280 : index
    %c0_134 = arith.constant 0 : index
    %189 = vector.load %arg7[%c280_133, %c0_134] : memref<400x256xf32, #tpu.memory_space<vmem>>, vector<8x256xf32>
    tpu.vector_store %arg7[%c280_133, %c0_134], %188 {strides = array<i32>} : memref<400x256xf32, #tpu.memory_space<vmem>>, vector<8x256xf32>,
    %c21_i32 = arith.constant 21 : i32
    %190 = tpu.dynamic_rotate %117 by %c21_i32 dim 1 : vector<8x256xf32>, i32 -> vector<8x256xf32>
    %c288_135 = arith.constant 288 : index
    %c0_136 = arith.constant 0 : index
    %191 = vector.load %arg7[%c288_135, %c0_136] : memref<400x256xf32, #tpu.memory_space<vmem>>, vector<8x256xf32>
    tpu.vector_store %arg7[%c288_135, %c0_136], %190 {strides = array<i32>} : memref<400x256xf32, #tpu.memory_space<vmem>>, vector<8x256xf32>,
    %c20_i32 = arith.constant 20 : i32
    %192 = tpu.dynamic_rotate %117 by %c20_i32 dim 1 : vector<8x256xf32>, i32 -> vector<8x256xf32>
    %c296_137 = arith.constant 296 : index
    %c0_138 = arith.constant 0 : index
    %193 = vector.load %arg7[%c296_137, %c0_138] : memref<400x256xf32, #tpu.memory_space<vmem>>, vector<8x256xf32>
    tpu.vector_store %arg7[%c296_137, %c0_138], %192 {strides = array<i32>} : memref<400x256xf32, #tpu.memory_space<vmem>>, vector<8x256xf32>,
    %c19_i32 = arith.constant 19 : i32
    %194 = tpu.dynamic_rotate %117 by %c19_i32 dim 1 : vector<8x256xf32>, i32 -> vector<8x256xf32>
    %c304_139 = arith.constant 304 : index
    %c0_140 = arith.constant 0 : index
    %195 = vector.load %arg7[%c304_139, %c0_140] : memref<400x256xf32, #tpu.memory_space<vmem>>, vector<8x256xf32>
    tpu.vector_store %arg7[%c304_139, %c0_140], %194 {strides = array<i32>} : memref<400x256xf32, #tpu.memory_space<vmem>>, vector<8x256xf32>,
    %c18_i32 = arith.constant 18 : i32
    %196 = tpu.dynamic_rotate %117 by %c18_i32 dim 1 : vector<8x256xf32>, i32 -> vector<8x256xf32>
    %c312_141 = arith.constant 312 : index
    %c0_142 = arith.constant 0 : index
    %197 = vector.load %arg7[%c312_141, %c0_142] : memref<400x256xf32, #tpu.memory_space<vmem>>, vector<8x256xf32>
    tpu.vector_store %arg7[%c312_141, %c0_142], %196 {strides = array<i32>} : memref<400x256xf32, #tpu.memory_space<vmem>>, vector<8x256xf32>,
    %c17_i32 = arith.constant 17 : i32
    %198 = tpu.dynamic_rotate %117 by %c17_i32 dim 1 : vector<8x256xf32>, i32 -> vector<8x256xf32>
    %c320_143 = arith.constant 320 : index
    %c0_144 = arith.constant 0 : index
    %199 = vector.load %arg7[%c320_143, %c0_144] : memref<400x256xf32, #tpu.memory_space<vmem>>, vector<8x256xf32>
    tpu.vector_store %arg7[%c320_143, %c0_144], %198 {strides = array<i32>} : memref<400x256xf32, #tpu.memory_space<vmem>>, vector<8x256xf32>,
    %c16_i32 = arith.constant 16 : i32
    %200 = tpu.dynamic_rotate %117 by %c16_i32 dim 1 : vector<8x256xf32>, i32 -> vector<8x256xf32>
    %c328_145 = arith.constant 328 : index
    %c0_146 = arith.constant 0 : index
    %201 = vector.load %arg7[%c328_145, %c0_146] : memref<400x256xf32, #tpu.memory_space<vmem>>, vector<8x256xf32>
    tpu.vector_store %arg7[%c328_145, %c0_146], %200 {strides = array<i32>} : memref<400x256xf32, #tpu.memory_space<vmem>>, vector<8x256xf32>,
    %c6_i32 = arith.constant 6 : i32
    %202 = tpu.dynamic_rotate %117 by %c6_i32 dim 1 : vector<8x256xf32>, i32 -> vector<8x256xf32>
    %c336_147 = arith.constant 336 : index
    %c0_148 = arith.constant 0 : index
    %203 = vector.load %arg7[%c336_147, %c0_148] : memref<400x256xf32, #tpu.memory_space<vmem>>, vector<8x256xf32>
    tpu.vector_store %arg7[%c336_147, %c0_148], %202 {strides = array<i32>} : memref<400x256xf32, #tpu.memory_space<vmem>>, vector<8x256xf32>,
    %c5_i32 = arith.constant 5 : i32
    %204 = tpu.dynamic_rotate %117 by %c5_i32 dim 1 : vector<8x256xf32>, i32 -> vector<8x256xf32>
    %c344_149 = arith.constant 344 : index
    %c0_150 = arith.constant 0 : index
    %205 = vector.load %arg7[%c344_149, %c0_150] : memref<400x256xf32, #tpu.memory_space<vmem>>, vector<8x256xf32>
    tpu.vector_store %arg7[%c344_149, %c0_150], %204 {strides = array<i32>} : memref<400x256xf32, #tpu.memory_space<vmem>>, vector<8x256xf32>,
    %c4_i32 = arith.constant 4 : i32
    %206 = tpu.dynamic_rotate %117 by %c4_i32 dim 1 : vector<8x256xf32>, i32 -> vector<8x256xf32>
    %c352_151 = arith.constant 352 : index
    %c0_152 = arith.constant 0 : index
    %207 = vector.load %arg7[%c352_151, %c0_152] : memref<400x256xf32, #tpu.memory_space<vmem>>, vector<8x256xf32>
    tpu.vector_store %arg7[%c352_151, %c0_152], %206 {strides = array<i32>} : memref<400x256xf32, #tpu.memory_space<vmem>>, vector<8x256xf32>,
    %c3_i32 = arith.constant 3 : i32
    %208 = tpu.dynamic_rotate %117 by %c3_i32 dim 1 : vector<8x256xf32>, i32 -> vector<8x256xf32>
    %c360_153 = arith.constant 360 : index
    %c0_154 = arith.constant 0 : index
    %209 = vector.load %arg7[%c360_153, %c0_154] : memref<400x256xf32, #tpu.memory_space<vmem>>, vector<8x256xf32>
    tpu.vector_store %arg7[%c360_153, %c0_154], %208 {strides = array<i32>} : memref<400x256xf32, #tpu.memory_space<vmem>>, vector<8x256xf32>,
    %c2_i32 = arith.constant 2 : i32
    %210 = tpu.dynamic_rotate %117 by %c2_i32 dim 1 : vector<8x256xf32>, i32 -> vector<8x256xf32>
    %c368_155 = arith.constant 368 : index
    %c0_156 = arith.constant 0 : index
    %211 = vector.load %arg7[%c368_155, %c0_156] : memref<400x256xf32, #tpu.memory_space<vmem>>, vector<8x256xf32>
    tpu.vector_store %arg7[%c368_155, %c0_156], %210 {strides = array<i32>} : memref<400x256xf32, #tpu.memory_space<vmem>>, vector<8x256xf32>,
    %c1_i32 = arith.constant 1 : i32
    %212 = tpu.dynamic_rotate %117 by %c1_i32 dim 1 : vector<8x256xf32>, i32 -> vector<8x256xf32>
    %c376_157 = arith.constant 376 : index
    %c0_158 = arith.constant 0 : index
    %213 = vector.load %arg7[%c376_157, %c0_158] : memref<400x256xf32, #tpu.memory_space<vmem>>, vector<8x256xf32>
    tpu.vector_store %arg7[%c376_157, %c0_158], %212 {strides = array<i32>} : memref<400x256xf32, #tpu.memory_space<vmem>>, vector<8x256xf32>,
    %c384_159 = arith.constant 384 : index
    %c0_160 = arith.constant 0 : index
    %214 = vector.load %arg7[%c384_159, %c0_160] : memref<400x256xf32, #tpu.memory_space<vmem>>, vector<8x256xf32>
    tpu.vector_store %arg7[%c384_159, %c0_160], %117 {strides = array<i32>} : memref<400x256xf32, #tpu.memory_space<vmem>>, vector<8x256xf32>,
    %c0_161 = arith.constant 0 : index
    %c0_162 = arith.constant 0 : index
    %215 = vector.load %arg3[%c0_161, %c0_162] : memref<8x400xf32, #tpu.memory_space<vmem>>, vector<8x400xf32>
    %c0_163 = arith.constant 0 : index
    %c0_164 = arith.constant 0 : index
    %216 = vector.load %arg7[%c0_163, %c0_164] : memref<400x256xf32, #tpu.memory_space<vmem>>, vector<400x256xf32>
    %cst_165 = arith.constant dense<0.000000e+00> : vector<8x256xf32>
    %217 = tpu.matmul %215, %216, %cst_165 {dimension_numbers = #tpu.dot_dimension_numbers<[1], [0], [0], [1], [0, 0, 1, 1], [], []>} : vector<8x400xf32>, vector<400x256xf32>, vector<8x256xf32> -> vector<8x256xf32>
    %218 = arith.subf %10, %217 : vector<8x256xf32>
    %c0_166 = arith.constant 0 : index
    %c0_167 = arith.constant 0 : index
    %c0_168 = arith.constant 0 : index
    %219 = vector.load %arg6[%c0_166, %c0_167, %c0_168] : memref<1x8x256xf32, #tpu.memory_space<vmem>>, vector<1x8x256xf32>
    %220 = vector.shape_cast %219 : vector<1x8x256xf32> to vector<8x256xf32>
    %221 = vector.shape_cast %218 : vector<8x256xf32> to vector<1x8x256xf32>
    tpu.vector_store %arg6[%c0_166, %c0_167, %c0_168], %221 {strides = array<i32>} : memref<1x8x256xf32, #tpu.memory_space<vmem>>, vector<1x8x256xf32>,
    return
  }
  func.func @transform_0(%arg0: i32) -> (i32, i32, i32) {
    %c0_i32 = arith.constant 0 : i32
    %c0_i32_0 = arith.constant 0 : i32
    %c0_i32_1 = arith.constant 0 : i32
    return %arg0, %c0_i32, %c0_i32_0 : i32, i32, i32
  }
  func.func @transform_1(%arg0: i32) -> (i32, i32) {
    %c0_i32 = arith.constant 0 : i32
    %c0_i32_0 = arith.constant 0 : i32
    %c0_i32_1 = arith.constant 0 : i32
    return %c0_i32, %c0_i32_0 : i32, i32
  }
  func.func @transform_2(%arg0: i32) -> (i32, i32) {
    %c0_i32 = arith.constant 0 : i32
    %c0_i32_0 = arith.constant 0 : i32
    %c0_i32_1 = arith.constant 0 : i32
    return %c0_i32, %c0_i32_0 : i32, i32
  }
  func.func @transform_3(%arg0: i32) -> (i32, i32) {
    %c0_i32 = arith.constant 0 : i32
    %c0_i32_0 = arith.constant 0 : i32
    %c0_i32_1 = arith.constant 0 : i32
    return %c0_i32, %c0_i32_0 : i32, i32
  }
  func.func @transform_4(%arg0: i32) -> i32 {
    %c0_i32 = arith.constant 0 : i32
    %c0_i32_0 = arith.constant 0 : i32
    return %c0_i32 : i32
  }
  func.func @transform_5(%arg0: i32) -> (i32, i32, i32) {
    %c0_i32 = arith.constant 0 : i32
    %c0_i32_0 = arith.constant 0 : i32
    %c0_i32_1 = arith.constant 0 : i32
    return %arg0, %c0_i32, %c0_i32_0 : i32, i32, i32
  }
}

</mosaic_0001>

<llo_original>
// kernel: tpu_custom_call.1
$region0: #{tpu_custom_call.1}
  #allocation0 [shape = 'u32[]', space=smem, size = 0x4, offset = 0x4, fixed_abs, tag = 'smem constant byte address 0x4 - core index']
  #allocation1 [shape = 'u32[72,128]{1,0:T(1,128)}', space=vmem, size = 0x9000, scoped, tag = 'internal scratch']
  #allocation2 [shape = 'f32[400,256]{1,0:T(8,128)}', space=vmem, size = 0x64000, scoped, tag = 'scratch operand']
  #allocation3 [shape = 'f32[1]{0:T(128)S(6)}', space=smem, size = 0x200, scoped, tag = 'scoped memory for tpu_custom_call.1']
  %s0 = inlined_call_operand.hbm [shape: f32[2,8,256], index: 0, kind: input, shape index: {}]
  %s1 = inlined_call_operand.hbm [shape: f32[8,400], index: 1, kind: input, shape index: {}]
  %s2 = inlined_call_operand.hbm [shape: f32[8,400], index: 2, kind: input, shape index: {}]
  %s3 = inlined_call_operand.vmem [shape: f32[1,256], index: 3, kind: input, shape index: {}]
  %s4 = inlined_call_operand.<no memory space> [shape: f32[1], index: 4, kind: input, shape index: {}]
  %s5 = inlined_call_operand.hbm [shape: f32[2,8,256], index: 5, kind: output, shape index: {}]
  %s6 = sld [smem:[#allocation0]]
  $region65: #{tpu_custom_call.1} parent=0
    _
  %s8 = ssub.s32 1, %s6
  %s9 = scalar_select 0, %s8, %s6
  %10 = sst [smem:[#allocation3]] %s4
  $region1: #{tpu_custom_call.1} parent=0
    #allocation4 [shape = 'u8[16384]{0}', space=vmem, size = 0x4000, scoped, tag = 'input window, operand 0']
    #allocation5 [shape = 's32[2]{0}', space=sflag, size = 0x8, scoped, tag = 'scoped memory for tpu_custom_call.1']
    #allocation6 [shape = 's32[2]{0}', space=sflag, size = 0x8, scoped, tag = 'scoped memory for tpu_custom_call.1']
    #allocation7 [shape = 'u8[16384]{0}', space=vmem, size = 0x4000, scoped, tag = 'input window, operand 1, single buffered']
    #allocation8 [shape = 's32[1]{0}', space=sflag, size = 0x4, scoped, tag = 'scoped memory for tpu_custom_call.1']
    #allocation9 [shape = 'u8[16384]{0}', space=vmem, size = 0x4000, scoped, tag = 'input window, operand 2, single buffered']
    #allocation10 [shape = 'u8[16384]{0}', space=vmem, size = 0x4000, scoped, tag = 'output window, operand 0']
    %11 = vsyncpa [#allocation5], 0
    %s12 = scalar_lea.sflag [#allocation5], 1
    %13 = vsyncpa %s12, 0
    %14 = vsyncpa [#allocation8], 0
    %15 = vsyncpa [#allocation6], 0
    %s16 = scalar_lea.sflag [#allocation6], 1
    %17 = vsyncpa %s16, 0
    loop: start=0, step=1, limit=4
    $region2: #{tpu_custom_call.1} parent=1 // loop_pre_header
      _
    $region3: #{tpu_custom_call.1} parent=1 // loop_header
      %s19 = sphi 0, %s23
      %p20 = scmp.ge.s32.totalorder %s19, 4
      %s29 = sphi 0, %s31
      %s32 = sphi 0, %s29
      %s33 = sphi 0, %s32
      %s49 = sphi 0, %s33
      %s53 = sphi 0, %s53
      %s55 = sphi 0, %s53
      %s56 = sphi 0, %s55
      %s70 = sphi 0, %s56
      %s74 = sphi 0, %s74
      %s76 = sphi 0, %s74
      %s77 = sphi 0, %s76
      %s91 = sphi 0, %s77
      %s95 = sphi 0, %s95
      %s97 = sphi 0, %s95
      %s98 = sphi 0, %s97
      %s112 = sphi 0, %s98
      %s116 = sphi 0, %s116
      %s118 = sphi 0, %s116
      %s119 = sphi 0, %s118
      %s133 = sphi 0, %s119
      %s139 = sphi 0, %s141
      %s142 = sphi 0, %s139
      %s143 = sphi 0, %s142
      %s159 = sphi 0, %s143
    $region4: #{tpu_custom_call.1} parent=1 // loop_header_branch
      %22 = sbr.rel (%p20) target = $region8
    $region5: #{tpu_custom_call.1} parent=1 // loop_body
      %s24 = ssub.s32 %s19, 1
      %s25 = ssub.s32 %s19, 2
      %s26 = sadd.s32 %s19, 1
      %s27 = ssub.s32 %s19, %s26
      %p28 = scmp.eq.s32.totalorder %s27, 0
      %s30 = sadd.s32 %s29, 1
      %s31 = scalar_select %p28, %s29, %s30
      %p34 = pneg %p28
      %p35 = scmp.eq.s32.totalorder %s19, 1
      %p36 = por %p34, %p35
      %p37 = scmp.ne.s32.totalorder %s29, %s32
      %p38 = scmp.eq.s32.totalorder %s19, 0
      %p39 = por %p37, %p38
      %p40 = scmp.ne.s32.totalorder %s29, %s32
      %p41 = scmp.eq.s32.totalorder %s24, 1
      %p42 = por %p40, %p41
      %p43 = scmp.ne.s32.totalorder %s32, %s33
      %p44 = scmp.eq.s32.totalorder %s24, 0
      %p45 = por %p43, %p44
      %p46 = scmp.ne.s32.totalorder %s32, %s33
      %p47 = scmp.eq.s32.totalorder %s25, 1
      %p48 = por %p46, %p47
      %p50 = scmp.ne.s32.totalorder %s33, %s49
      %p51 = scmp.eq.s32.totalorder %s25, 0
      %p52 = por %p50, %p51
      %s54 = sadd.s32 %s53, 1
      %p57 = scmp.eq.s32.totalorder %s19, 1
      %p58 = scmp.ne.s32.totalorder %s53, %s55
      %p59 = scmp.eq.s32.totalorder %s19, 0
      %p60 = por %p58, %p59
      %p61 = scmp.ne.s32.totalorder %s53, %s55
      %p62 = scmp.eq.s32.totalorder %s24, 1
      %p63 = por %p61, %p62
      %p64 = scmp.ne.s32.totalorder %s55, %s56
      %p65 = scmp.eq.s32.totalorder %s24, 0
      %p66 = por %p64, %p65
      %p67 = scmp.ne.s32.totalorder %s55, %s56
      %p68 = scmp.eq.s32.totalorder %s25, 1
      %p69 = por %p67, %p68
      %p71 = scmp.ne.s32.totalorder %s56, %s70
      %p72 = scmp.eq.s32.totalorder %s25, 0
      %p73 = por %p71, %p72
      %s75 = sadd.s32 %s74, 1
      %p78 = scmp.eq.s32.totalorder %s19, 1
      %p79 = scmp.ne.s32.totalorder %s74, %s76
      %p80 = scmp.eq.s32.totalorder %s19, 0
      %p81 = por %p79, %p80
      %p82 = scmp.ne.s32.totalorder %s74, %s76
      %p83 = scmp.eq.s32.totalorder %s24, 1
      %p84 = por %p82, %p83
      %p85 = scmp.ne.s32.totalorder %s76, %s77
      %p86 = scmp.eq.s32.totalorder %s24, 0
      %p87 = por %p85, %p86
      %p88 = scmp.ne.s32.totalorder %s76, %s77
      %p89 = scmp.eq.s32.totalorder %s25, 1
      %p90 = por %p88, %p89
      %p92 = scmp.ne.s32.totalorder %s77, %s91
      %p93 = scmp.eq.s32.totalorder %s25, 0
      %p94 = por %p92, %p93
      %s96 = sadd.s32 %s95, 1
      %p99 = scmp.eq.s32.totalorder %s19, 1
      %p100 = scmp.ne.s32.totalorder %s95, %s97
      %p101 = scmp.eq.s32.totalorder %s19, 0
      %p102 = por %p100, %p101
      %p103 = scmp.ne.s32.totalorder %s95, %s97
      %p104 = scmp.eq.s32.totalorder %s24, 1
      %p105 = por %p103, %p104
      %p106 = scmp.ne.s32.totalorder %s97, %s98
      %p107 = scmp.eq.s32.totalorder %s24, 0
      %p108 = por %p106, %p107
      %p109 = scmp.ne.s32.totalorder %s97, %s98
      %p110 = scmp.eq.s32.totalorder %s25, 1
      %p111 = por %p109, %p110
      %p113 = scmp.ne.s32.totalorder %s98, %s112
      %p114 = scmp.eq.s32.totalorder %s25, 0
      %p115 = por %p113, %p114
      %s117 = sadd.s32 %s116, 1
      %p120 = scmp.eq.s32.totalorder %s19, 1
      %p121 = scmp.ne.s32.totalorder %s116, %s118
      %p122 = scmp.eq.s32.totalorder %s19, 0
      %p123 = por %p121, %p122
      %p124 = scmp.ne.s32.totalorder %s116, %s118
      %p125 = scmp.eq.s32.totalorder %s24, 1
      %p126 = por %p124, %p125
      %p127 = scmp.ne.s32.totalorder %s118, %s119
      %p128 = scmp.eq.s32.totalorder %s24, 0
      %p129 = por %p127, %p128
      %p130 = scmp.ne.s32.totalorder %s118, %s119
      %p131 = scmp.eq.s32.totalorder %s25, 1
      %p132 = por %p130, %p131
      %p134 = scmp.ne.s32.totalorder %s119, %s133
      %p135 = scmp.eq.s32.totalorder %s25, 0
      %p136 = por %p134, %p135
      %s137 = ssub.s32 %s19, %s26
      %p138 = scmp.eq.s32.totalorder %s137, 0
      %s140 = sadd.s32 %s139, 1
      %s141 = scalar_select %p138, %s139, %s140
      %p144 = pneg %p138
      %p145 = scmp.eq.s32.totalorder %s19, 1
      %p146 = por %p144, %p145
      %p147 = scmp.ne.s32.totalorder %s139, %s142
      %p148 = scmp.eq.s32.totalorder %s19, 0
      %p149 = por %p147, %p148
      %p150 = scmp.ne.s32.totalorder %s139, %s142
      %p151 = scmp.eq.s32.totalorder %s24, 1
      %p152 = por %p150, %p151
      %p153 = scmp.ne.s32.totalorder %s142, %s143
      %p154 = scmp.eq.s32.totalorder %s24, 0
      %p155 = por %p153, %p154
      %p156 = scmp.ne.s32.totalorder %s142, %s143
      %p157 = scmp.eq.s32.totalorder %s25, 1
      %p158 = por %p156, %p157
      %p160 = scmp.ne.s32.totalorder %s143, %s159
      %p161 = scmp.eq.s32.totalorder %s25, 0
      %p162 = por %p160, %p161
      %p163 = scmp.le.s32.totalorder 1, %s19
      %p164 = scmp.lt.s32.totalorder %s19, 3
      %p165 = pnand %p163, %p164
      %p166 = pneg %p165
      // Predicated region
      $region9: #{tpu_custom_call.1} parent=5 // pred_check
        _
      $region10: #{tpu_custom_call.1} parent=5 // pred_check_branch
        %168 = sbr.rel (%p165) target = $region12
      $region11: #{tpu_custom_call.1} parent=5 // pred_region
        %s169 = ssub.s32 %s19, 1
        // Predicated region
        $region13: #{tpu_custom_call.1} parent=11 // pred_check
          %p170 = pneg %p66
        $region14: #{tpu_custom_call.1} parent=11 // pred_check_branch
          %172 = sbr.rel (%p170) target = $region16
        $region15: #{tpu_custom_call.1} parent=11 // pred_region
          %174 = vsyncadd [#allocation8], 0
          %s176 = sshll.u32 %s1, 4
          %s177 = int_to_ptr.hbm [resolvable:$true] %s176
          %s178 = sshll.u32 [#allocation7], 4
          %s179 = int_to_ptr.vmem [resolvable:$true] %s178
          %181 = dma.hbm_to_vmem [thread:$0]  %s177, 512, %s179, [#allocation8]
        $region16: #{tpu_custom_call.1} parent=11 // pred_fallthru
          _
        // Predicated region
        $region17: #{tpu_custom_call.1} parent=11 // pred_check
          %p182 = pneg %p87
        $region18: #{tpu_custom_call.1} parent=11 // pred_check_branch
          %184 = sbr.rel (%p182) target = $region20
        $region19: #{tpu_custom_call.1} parent=11 // pred_region
          %186 = vsyncadd [#allocation8], 0
          %s188 = sshll.u32 %s2, 4
          %s189 = int_to_ptr.hbm [resolvable:$true] %s188
          %s190 = sshll.u32 [#allocation9], 4
          %s191 = int_to_ptr.vmem [resolvable:$true] %s190
          %193 = dma.hbm_to_vmem [thread:$0]  %s189, 512, %s191, [#allocation8]
        $region20: #{tpu_custom_call.1} parent=11 // pred_fallthru
          _
        // Predicated region
        $region21: #{tpu_custom_call.1} parent=11 // pred_check
          %p194 = pneg %p108
        $region22: #{tpu_custom_call.1} parent=11 // pred_check_branch
          %196 = sbr.rel (%p194) target = $region24
        $region23: #{tpu_custom_call.1} parent=11 // pred_region
          _
        $region24: #{tpu_custom_call.1} parent=11 // pred_fallthru
          _
        // Predicated region
        $region25: #{tpu_custom_call.1} parent=11 // pred_check
          %p197 = pneg %p129
        $region26: #{tpu_custom_call.1} parent=11 // pred_check_branch
          %199 = sbr.rel (%p197) target = $region28
        $region27: #{tpu_custom_call.1} parent=11 // pred_region
          _
        $region28: #{tpu_custom_call.1} parent=11 // pred_fallthru
          _
      $region12: #{tpu_custom_call.1} parent=5 // pred_fallthru
        _
      %p200 = scmp.lt.s32.totalorder %s19, 2
      // Predicated region
      $region29: #{tpu_custom_call.1} parent=5 // pred_check
        %p201 = pneg %p200
      $region30: #{tpu_custom_call.1} parent=5 // pred_check_branch
        %203 = sbr.rel (%p201) target = $region32
      $region31: #{tpu_custom_call.1} parent=5 // pred_region
        // Predicated region
        $region33: #{tpu_custom_call.1} parent=31 // pred_check
          %p204 = pneg %p39
        $region34: #{tpu_custom_call.1} parent=31 // pred_check_branch
          %206 = sbr.rel (%p204) target = $region36
        $region35: #{tpu_custom_call.1} parent=31 // pred_region
          %s207 = sand.u32 %s29, 1
          %s208 = scalar_lea.sflag [#allocation5], %s207
          %s209 = sand.u32 %s29, 1
          %s210 = smul.addr %s209, 16
          %s211 = scalar_lea.vmem [#allocation4], %s210
          %213 = vsyncadd %s208, 0
          %s214 = smul.addr %s19, 2
          %s215 = smul.addr %s214, 8
          %s216 = scalar_lea.hbm %s0, %s215
          %s218 = sshll.u32 %s216, 4
          %s219 = int_to_ptr.hbm [resolvable:$true] %s218
          %s220 = sshll.u32 %s211, 4
          %s221 = int_to_ptr.vmem [resolvable:$true] %s220
          %223 = dma.hbm_to_vmem [thread:$0]  %s219, 256, %s221, %s208
        $region36: #{tpu_custom_call.1} parent=31 // pred_fallthru
          _
      $region32: #{tpu_custom_call.1} parent=5 // pred_fallthru
        _
      %p224 = scmp.le.s32.totalorder 1, %s19
      %p225 = scmp.lt.s32.totalorder %s19, 3
      %p226 = pnand %p224, %p225
      %p227 = pneg %p226
      // Predicated region
      $region37: #{tpu_custom_call.1} parent=5 // pred_check
        _
      $region38: #{tpu_custom_call.1} parent=5 // pred_check_branch
        %229 = sbr.rel (%p226) target = $region40
      $region39: #{tpu_custom_call.1} parent=5 // pred_region
        %s230 = ssub.s32 %s19, 1
        %s231 = sand.u32 %s32, 1
        %s232 = scalar_lea.sflag [#allocation5], %s231
        %s233 = sand.u32 %s32, 1
        %s234 = smul.addr %s233, 16
        %s235 = scalar_lea.vmem [#allocation4], %s234
        // Predicated region
        $region41: #{tpu_custom_call.1} parent=39 // pred_check
          %p236 = pneg %p45
        $region42: #{tpu_custom_call.1} parent=39 // pred_check_branch
          %238 = sbr.rel (%p236) target = $region44
        $region43: #{tpu_custom_call.1} parent=39 // pred_region
          %240 = dma.done %s232, 256
        $region44: #{tpu_custom_call.1} parent=39 // pred_fallthru
          _
        // Predicated region
        $region45: #{tpu_custom_call.1} parent=39 // pred_check
          %p241 = pneg %p66
        $region46: #{tpu_custom_call.1} parent=39 // pred_check_branch
          %243 = sbr.rel (%p241) target = $region48
        $region47: #{tpu_custom_call.1} parent=39 // pred_region
          %245 = dma.done [#allocation8], 512
        $region48: #{tpu_custom_call.1} parent=39 // pred_fallthru
          _
        // Predicated region
        $region49: #{tpu_custom_call.1} parent=39 // pred_check
          %p246 = pneg %p87
        $region50: #{tpu_custom_call.1} parent=39 // pred_check_branch
          %248 = sbr.rel (%p246) target = $region52
        $region51: #{tpu_custom_call.1} parent=39 // pred_region
          %250 = dma.done [#allocation8], 512
        $region52: #{tpu_custom_call.1} parent=39 // pred_fallthru
          _
        %s251 = sand.u32 %s32, 1
        %s252 = scalar_lea.sflag [#allocation5], %s251
        %s253 = sand.u32 %s32, 1
        %s254 = smul.addr %s253, 16
        %s255 = scalar_lea.vmem [#allocation4], %s254
        %p256 = pneg %p45
        %p257 = pneg %p42
        %p258 = pneg %p66
        %p259 = pneg %p63
        %p260 = pneg %p87
        %p261 = pneg %p84
        %p262 = pneg %p108
        %p263 = pneg %p105
        %p264 = pneg %p129
        %p265 = pneg %p126
        %p266 = pneg %p155
        %p267 = pneg %p152
        %s268 = sand.u32 %s142, 1
        %s269 = scalar_lea.sflag [#allocation6], %s268
        %s270 = sand.u32 %s142, 1
        %s271 = smul.addr %s270, 16
        %s272 = scalar_lea.vmem [#allocation10], %s271
        %s273 = sld [smem:[#allocation3]]
        %v274 = vld [vmem:[%s3] sm:$0x3]
        %v275 = vlaneseq
        %v276 = vshrl.u32 %v275, 7
        %vm277 = vcmp.eq.s32.totalorder %v276, 0
        %v278 = vsel %vm277, 1.0, 0.0
        %279 = vst [vmem:[#allocation2 + $0x310] sm:$0xff] %v278
        %280 = vst [vmem:[#allocation2 + $0x318] sm:$0xff] %v278
        %v281 = vld [vmem:[%s235] sm:$0xff]
        %v282 = vld [vmem:[%s235 + $0x8] sm:$0xff]
        %283 = vst [vmem:[#allocation2] sm:$0xff] %v281
        %284 = vst [vmem:[#allocation2 + $0x8] sm:$0xff] %v282
        %285 = vrot.lane.b32.xlu0 %v281, 127
        %v286 = vpop.permute.xlu0 %285
        %287 = vrot.lane.b32.xlu0 %v282, 127
        %v288 = vpop.permute.xlu0 %287
        %v289 = vlaneseq
        %v290 = vand.u32 %v289, 127
        %vm291 = vcmp.lt.s32.totalorder %v290, 127
        %v292 = vsel %vm291, %v286, %v288
        %v293 = vsel %vm291, %v288, %v286
        %294 = vst [vmem:[#allocation2 + $0x10] sm:$0xff] %v292
        %295 = vst [vmem:[#allocation2 + $0x18] sm:$0xff] %v293
        %296 = vrot.lane.b32.xlu0 %v281, 126
        %v297 = vpop.permute.xlu0 %296
        %298 = vrot.lane.b32.xlu0 %v282, 126
        %v299 = vpop.permute.xlu0 %298
        %vm300 = vcmp.lt.s32.totalorder %v290, 126
        %v301 = vsel %vm300, %v297, %v299
        %v302 = vsel %vm300, %v299, %v297
        %303 = vst [vmem:[#allocation2 + $0x20] sm:$0xff] %v301
        %304 = vst [vmem:[#allocation2 + $0x28] sm:$0xff] %v302
        %305 = vrot.lane.b32.xlu0 %v281, 125
        %v306 = vpop.permute.xlu0 %305
        %307 = vrot.lane.b32.xlu0 %v282, 125
        %v308 = vpop.permute.xlu0 %307
        %vm309 = vcmp.lt.s32.totalorder %v290, 125
        %v310 = vsel %vm309, %v306, %v308
        %v311 = vsel %vm309, %v308, %v306
        %312 = vst [vmem:[#allocation2 + $0x30] sm:$0xff] %v310
        %313 = vst [vmem:[#allocation2 + $0x38] sm:$0xff] %v311
        %314 = vrot.lane.b32.xlu0 %v281, 124
        %v315 = vpop.permute.xlu0 %314
        %316 = vrot.lane.b32.xlu0 %v282, 124
        %v317 = vpop.permute.xlu0 %316
        %vm318 = vcmp.lt.s32.totalorder %v290, 124
        %v319 = vsel %vm318, %v315, %v317
        %v320 = vsel %vm318, %v317, %v315
        %321 = vst [vmem:[#allocation2 + $0x40] sm:$0xff] %v319
        %322 = vst [vmem:[#allocation2 + $0x48] sm:$0xff] %v320
        %323 = vrot.lane.b32.xlu0 %v281, 123
        %v324 = vpop.permute.xlu0 %323
        %325 = vrot.lane.b32.xlu0 %v282, 123
        %v326 = vpop.permute.xlu0 %325
        %vm327 = vcmp.lt.s32.totalorder %v290, 123
        %v328 = vsel %vm327, %v324, %v326
        %v329 = vsel %vm327, %v326, %v324
        %330 = vst [vmem:[#allocation2 + $0x50] sm:$0xff] %v328
        %331 = vst [vmem:[#allocation2 + $0x58] sm:$0xff] %v329
        %332 = vrot.lane.b32.xlu0 %v281, 122
        %v333 = vpop.permute.xlu0 %332
        %334 = vrot.lane.b32.xlu0 %v282, 122
        %v335 = vpop.permute.xlu0 %334
        %vm336 = vcmp.lt.s32.totalorder %v290, 122
        %v337 = vsel %vm336, %v333, %v335
        %v338 = vsel %vm336, %v335, %v333
        %339 = vst [vmem:[#allocation2 + $0x60] sm:$0xff] %v337
        %340 = vst [vmem:[#allocation2 + $0x68] sm:$0xff] %v338
        %341 = vrot.lane.b32.xlu0 %v281, 112
        %v342 = vpop.permute.xlu0 %341
        %343 = vrot.lane.b32.xlu0 %v282, 112
        %v344 = vpop.permute.xlu0 %343
        %vm345 = vcmp.lt.s32.totalorder %v290, 112
        %v346 = vsel %vm345, %v342, %v344
        %v347 = vsel %vm345, %v344, %v342
        %348 = vst [vmem:[#allocation2 + $0x70] sm:$0xff] %v346
        %349 = vst [vmem:[#allocation2 + $0x78] sm:$0xff] %v347
        %350 = vrot.lane.b32.xlu0 %v281, 111
        %v351 = vpop.permute.xlu0 %350
        %352 = vrot.lane.b32.xlu0 %v282, 111
        %v353 = vpop.permute.xlu0 %352
        %vm354 = vcmp.lt.s32.totalorder %v290, 111
        %v355 = vsel %vm354, %v351, %v353
        %v356 = vsel %vm354, %v353, %v351
        %357 = vst [vmem:[#allocation2 + $0x80] sm:$0xff] %v355
        %358 = vst [vmem:[#allocation2 + $0x88] sm:$0xff] %v356
        %359 = vrot.lane.b32.xlu0 %v281, 110
        %v360 = vpop.permute.xlu0 %359
        %361 = vrot.lane.b32.xlu0 %v282, 110
        %v362 = vpop.permute.xlu0 %361
        %vm363 = vcmp.lt.s32.totalorder %v290, 110
        %v364 = vsel %vm363, %v360, %v362
        %v365 = vsel %vm363, %v362, %v360
        %366 = vst [vmem:[#allocation2 + $0x90] sm:$0xff] %v364
        %367 = vst [vmem:[#allocation2 + $0x98] sm:$0xff] %v365
        %368 = vrot.lane.b32.xlu0 %v281, 109
        %v369 = vpop.permute.xlu0 %368
        %370 = vrot.lane.b32.xlu0 %v282, 109
        %v371 = vpop.permute.xlu0 %370
        %vm372 = vcmp.lt.s32.totalorder %v290, 109
        %v373 = vsel %vm372, %v369, %v371
        %v374 = vsel %vm372, %v371, %v369
        %375 = vst [vmem:[#allocation2 + $0xa0] sm:$0xff] %v373
        %376 = vst [vmem:[#allocation2 + $0xa8] sm:$0xff] %v374
        %377 = vrot.lane.b32.xlu0 %v281, 108
        %v378 = vpop.permute.xlu0 %377
        %379 = vrot.lane.b32.xlu0 %v282, 108
        %v380 = vpop.permute.xlu0 %379
        %vm381 = vcmp.lt.s32.totalorder %v290, 108
        %v382 = vsel %vm381, %v378, %v380
        %v383 = vsel %vm381, %v380, %v378
        %384 = vst [vmem:[#allocation2 + $0xb0] sm:$0xff] %v382
        %385 = vst [vmem:[#allocation2 + $0xb8] sm:$0xff] %v383
        %386 = vrot.lane.b32.xlu0 %v281, 107
        %v387 = vpop.permute.xlu0 %386
        %388 = vrot.lane.b32.xlu0 %v282, 107
        %v389 = vpop.permute.xlu0 %388
        %vm390 = vcmp.lt.s32.totalorder %v290, 107
        %v391 = vsel %vm390, %v387, %v389
        %v392 = vsel %vm390, %v389, %v387
        %393 = vst [vmem:[#allocation2 + $0xc0] sm:$0xff] %v391
        %394 = vst [vmem:[#allocation2 + $0xc8] sm:$0xff] %v392
        %395 = vrot.lane.b32.xlu0 %v281, 106
        %v396 = vpop.permute.xlu0 %395
        %397 = vrot.lane.b32.xlu0 %v282, 106
        %v398 = vpop.permute.xlu0 %397
        %vm399 = vcmp.lt.s32.totalorder %v290, 106
        %v400 = vsel %vm399, %v396, %v398
        %v401 = vsel %vm399, %v398, %v396
        %402 = vst [vmem:[#allocation2 + $0xd0] sm:$0xff] %v400
        %403 = vst [vmem:[#allocation2 + $0xd8] sm:$0xff] %v401
        %404 = vrot.lane.b32.xlu0 %v281, 96
        %v405 = vpop.permute.xlu0 %404
        %406 = vrot.lane.b32.xlu0 %v282, 96
        %v407 = vpop.permute.xlu0 %406
        %vm408 = vcmp.lt.s32.totalorder %v290, 96
        %v409 = vsel %vm408, %v405, %v407
        %v410 = vsel %vm408, %v407, %v405
        %411 = vst [vmem:[#allocation2 + $0xe0] sm:$0xff] %v409
        %412 = vst [vmem:[#allocation2 + $0xe8] sm:$0xff] %v410
        %413 = vrot.lane.b32.xlu0 %v281, 95
        %v414 = vpop.permute.xlu0 %413
        %415 = vrot.lane.b32.xlu0 %v282, 95
        %v416 = vpop.permute.xlu0 %415
        %vm417 = vcmp.lt.s32.totalorder %v290, 95
        %v418 = vsel %vm417, %v414, %v416
        %v419 = vsel %vm417, %v416, %v414
        %420 = vst [vmem:[#allocation2 + $0xf0] sm:$0xff] %v418
        %421 = vst [vmem:[#allocation2 + $0xf8] sm:$0xff] %v419
        %422 = vrot.lane.b32.xlu0 %v281, 94
        %v423 = vpop.permute.xlu0 %422
        %424 = vrot.lane.b32.xlu0 %v282, 94
        %v425 = vpop.permute.xlu0 %424
        %vm426 = vcmp.lt.s32.totalorder %v290, 94
        %v427 = vsel %vm426, %v423, %v425
        %v428 = vsel %vm426, %v425, %v423
        %429 = vst [vmem:[#allocation2 + $0x100] sm:$0xff] %v427
        %430 = vst [vmem:[#allocation2 + $0x108] sm:$0xff] %v428
        %431 = vrot.lane.b32.xlu0 %v281, 93
        %v432 = vpop.permute.xlu0 %431
        %433 = vrot.lane.b32.xlu0 %v282, 93
        %v434 = vpop.permute.xlu0 %433
        %vm435 = vcmp.lt.s32.totalorder %v290, 93
        %v436 = vsel %vm435, %v432, %v434
        %v437 = vsel %vm435, %v434, %v432
        %438 = vst [vmem:[#allocation2 + $0x110] sm:$0xff] %v436
        %439 = vst [vmem:[#allocation2 + $0x118] sm:$0xff] %v437
        %440 = vrot.lane.b32.xlu0 %v281, 92
        %v441 = vpop.permute.xlu0 %440
        %442 = vrot.lane.b32.xlu0 %v282, 92
        %v443 = vpop.permute.xlu0 %442
        %vm444 = vcmp.lt.s32.totalorder %v290, 92
        %v445 = vsel %vm444, %v441, %v443
        %v446 = vsel %vm444, %v443, %v441
        %447 = vst [vmem:[#allocation2 + $0x120] sm:$0xff] %v445
        %448 = vst [vmem:[#allocation2 + $0x128] sm:$0xff] %v446
        %449 = vrot.lane.b32.xlu0 %v281, 91
        %v450 = vpop.permute.xlu0 %449
        %451 = vrot.lane.b32.xlu0 %v282, 91
        %v452 = vpop.permute.xlu0 %451
        %vm453 = vcmp.lt.s32.totalorder %v290, 91
        %v454 = vsel %vm453, %v450, %v452
        %v455 = vsel %vm453, %v452, %v450
        %456 = vst [vmem:[#allocation2 + $0x130] sm:$0xff] %v454
        %457 = vst [vmem:[#allocation2 + $0x138] sm:$0xff] %v455
        %458 = vrot.lane.b32.xlu0 %v281, 90
        %v459 = vpop.permute.xlu0 %458
        %460 = vrot.lane.b32.xlu0 %v282, 90
        %v461 = vpop.permute.xlu0 %460
        %vm462 = vcmp.lt.s32.totalorder %v290, 90
        %v463 = vsel %vm462, %v459, %v461
        %v464 = vsel %vm462, %v461, %v459
        %465 = vst [vmem:[#allocation2 + $0x140] sm:$0xff] %v463
        %466 = vst [vmem:[#allocation2 + $0x148] sm:$0xff] %v464
        %467 = vrot.lane.b32.xlu0 %v281, 80
        %v468 = vpop.permute.xlu0 %467
        %469 = vrot.lane.b32.xlu0 %v282, 80
        %v470 = vpop.permute.xlu0 %469
        %vm471 = vcmp.lt.s32.totalorder %v290, 80
        %v472 = vsel %vm471, %v468, %v470
        %v473 = vsel %vm471, %v470, %v468
        %474 = vst [vmem:[#allocation2 + $0x150] sm:$0xff] %v472
        %475 = vst [vmem:[#allocation2 + $0x158] sm:$0xff] %v473
        %476 = vrot.lane.b32.xlu0 %v281, 79
        %v477 = vpop.permute.xlu0 %476
        %478 = vrot.lane.b32.xlu0 %v282, 79
        %v479 = vpop.permute.xlu0 %478
        %vm480 = vcmp.lt.s32.totalorder %v290, 79
        %v481 = vsel %vm480, %v477, %v479
        %v482 = vsel %vm480, %v479, %v477
        %483 = vst [vmem:[#allocation2 + $0x160] sm:$0xff] %v481
        %484 = vst [vmem:[#allocation2 + $0x168] sm:$0xff] %v482
        %485 = vrot.lane.b32.xlu0 %v281, 78
        %v486 = vpop.permute.xlu0 %485
        %487 = vrot.lane.b32.xlu0 %v282, 78
        %v488 = vpop.permute.xlu0 %487
        %vm489 = vcmp.lt.s32.totalorder %v290, 78
        %v490 = vsel %vm489, %v486, %v488
        %v491 = vsel %vm489, %v488, %v486
        %492 = vst [vmem:[#allocation2 + $0x170] sm:$0xff] %v490
        %493 = vst [vmem:[#allocation2 + $0x178] sm:$0xff] %v491
        %494 = vrot.lane.b32.xlu0 %v281, 77
        %v495 = vpop.permute.xlu0 %494
        %496 = vrot.lane.b32.xlu0 %v282, 77
        %v497 = vpop.permute.xlu0 %496
        %vm498 = vcmp.lt.s32.totalorder %v290, 77
        %v499 = vsel %vm498, %v495, %v497
        %v500 = vsel %vm498, %v497, %v495
        %501 = vst [vmem:[#allocation2 + $0x180] sm:$0xff] %v499
        %502 = vst [vmem:[#allocation2 + $0x188] sm:$0xff] %v500
        %503 = vrot.lane.b32.xlu0 %v281, 76
        %v504 = vpop.permute.xlu0 %503
        %505 = vrot.lane.b32.xlu0 %v282, 76
        %v506 = vpop.permute.xlu0 %505
        %vm507 = vcmp.lt.s32.totalorder %v290, 76
        %v508 = vsel %vm507, %v504, %v506
        %v509 = vsel %vm507, %v506, %v504
        %510 = vst [vmem:[#allocation2 + $0x190] sm:$0xff] %v508
        %511 = vst [vmem:[#allocation2 + $0x198] sm:$0xff] %v509
        %512 = vrot.lane.b32.xlu0 %v281, 75
        %v513 = vpop.permute.xlu0 %512
        %514 = vrot.lane.b32.xlu0 %v282, 75
        %v515 = vpop.permute.xlu0 %514
        %vm516 = vcmp.lt.s32.totalorder %v290, 75
        %v517 = vsel %vm516, %v513, %v515
        %v518 = vsel %vm516, %v515, %v513
        %519 = vst [vmem:[#allocation2 + $0x1a0] sm:$0xff] %v517
        %520 = vst [vmem:[#allocation2 + $0x1a8] sm:$0xff] %v518
        %521 = vrot.lane.b32.xlu0 %v281, 74
        %v522 = vpop.permute.xlu0 %521
        %523 = vrot.lane.b32.xlu0 %v282, 74
        %v524 = vpop.permute.xlu0 %523
        %vm525 = vcmp.lt.s32.totalorder %v290, 74
        %v526 = vsel %vm525, %v522, %v524
        %v527 = vsel %vm525, %v524, %v522
        %528 = vst [vmem:[#allocation2 + $0x1b0] sm:$0xff] %v526
        %529 = vst [vmem:[#allocation2 + $0x1b8] sm:$0xff] %v527
        %530 = vrot.lane.b32.xlu0 %v281, 64
        %v531 = vpop.permute.xlu0 %530
        %532 = vrot.lane.b32.xlu0 %v282, 64
        %v533 = vpop.permute.xlu0 %532
        %vm534 = vcmp.lt.s32.totalorder %v290, 64
        %v535 = vsel %vm534, %v531, %v533
        %v536 = vsel %vm534, %v533, %v531
        %537 = vst [vmem:[#allocation2 + $0x1c0] sm:$0xff] %v535
        %538 = vst [vmem:[#allocation2 + $0x1c8] sm:$0xff] %v536
        %539 = vrot.lane.b32.xlu0 %v281, 63
        %v540 = vpop.permute.xlu0 %539
        %541 = vrot.lane.b32.xlu0 %v282, 63
        %v542 = vpop.permute.xlu0 %541
        %vm543 = vcmp.lt.s32.totalorder %v290, 63
        %v544 = vsel %vm543, %v540, %v542
        %v545 = vsel %vm543, %v542, %v540
        %546 = vst [vmem:[#allocation2 + $0x1d0] sm:$0xff] %v544
        %547 = vst [vmem:[#allocation2 + $0x1d8] sm:$0xff] %v545
        %548 = vrot.lane.b32.xlu0 %v281, 62
        %v549 = vpop.permute.xlu0 %548
        %550 = vrot.lane.b32.xlu0 %v282, 62
        %v551 = vpop.permute.xlu0 %550
        %vm552 = vcmp.lt.s32.totalorder %v290, 62
        %v553 = vsel %vm552, %v549, %v551
        %v554 = vsel %vm552, %v551, %v549
        %555 = vst [vmem:[#allocation2 + $0x1e0] sm:$0xff] %v553
        %556 = vst [vmem:[#allocation2 + $0x1e8] sm:$0xff] %v554
        %557 = vrot.lane.b32.xlu0 %v281, 61
        %v558 = vpop.permute.xlu0 %557
        %559 = vrot.lane.b32.xlu0 %v282, 61
        %v560 = vpop.permute.xlu0 %559
        %vm561 = vcmp.lt.s32.totalorder %v290, 61
        %v562 = vsel %vm561, %v558, %v560
        %v563 = vsel %vm561, %v560, %v558
        %564 = vst [vmem:[#allocation2 + $0x1f0] sm:$0xff] %v562
        %565 = vst [vmem:[#allocation2 + $0x1f8] sm:$0xff] %v563
        %566 = vrot.lane.b32.xlu0 %v281, 60
        %v567 = vpop.permute.xlu0 %566
        %568 = vrot.lane.b32.xlu0 %v282, 60
        %v569 = vpop.permute.xlu0 %568
        %vm570 = vcmp.lt.s32.totalorder %v290, 60
        %v571 = vsel %vm570, %v567, %v569
        %v572 = vsel %vm570, %v569, %v567
        %573 = vst [vmem:[#allocation2 + $0x200] sm:$0xff] %v571
        %574 = vst [vmem:[#allocation2 + $0x208] sm:$0xff] %v572
        %575 = vrot.lane.b32.xlu0 %v281, 59
        %v576 = vpop.permute.xlu0 %575
        %577 = vrot.lane.b32.xlu0 %v282, 59
        %v578 = vpop.permute.xlu0 %577
        %vm579 = vcmp.lt.s32.totalorder %v290, 59
        %v580 = vsel %vm579, %v576, %v578
        %v581 = vsel %vm579, %v578, %v576
        %582 = vst [vmem:[#allocation2 + $0x210] sm:$0xff] %v580
        %583 = vst [vmem:[#allocation2 + $0x218] sm:$0xff] %v581
        %584 = vrot.lane.b32.xlu0 %v281, 58
        %v585 = vpop.permute.xlu0 %584
        %586 = vrot.lane.b32.xlu0 %v282, 58
        %v587 = vpop.permute.xlu0 %586
        %vm588 = vcmp.lt.s32.totalorder %v290, 58
        %v589 = vsel %vm588, %v585, %v587
        %v590 = vsel %vm588, %v587, %v585
        %591 = vst [vmem:[#allocation2 + $0x220] sm:$0xff] %v589
        %592 = vst [vmem:[#allocation2 + $0x228] sm:$0xff] %v590
        %593 = vrot.lane.b32.xlu0 %v281, 48
        %v594 = vpop.permute.xlu0 %593
        %595 = vrot.lane.b32.xlu0 %v282, 48
        %v596 = vpop.permute.xlu0 %595
        %vm597 = vcmp.lt.s32.totalorder %v290, 48
        %v598 = vsel %vm597, %v594, %v596
        %v599 = vsel %vm597, %v596, %v594
        %600 = vst [vmem:[#allocation2 + $0x230] sm:$0xff] %v598
        %601 = vst [vmem:[#allocation2 + $0x238] sm:$0xff] %v599
        %602 = vrot.lane.b32.xlu0 %v281, 47
        %v603 = vpop.permute.xlu0 %602
        %604 = vrot.lane.b32.xlu0 %v282, 47
        %v605 = vpop.permute.xlu0 %604
        %vm606 = vcmp.lt.s32.totalorder %v290, 47
        %v607 = vsel %vm606, %v603, %v605
        %v608 = vsel %vm606, %v605, %v603
        %609 = vst [vmem:[#allocation2 + $0x240] sm:$0xff] %v607
        %610 = vst [vmem:[#allocation2 + $0x248] sm:$0xff] %v608
        %611 = vrot.lane.b32.xlu0 %v281, 46
        %v612 = vpop.permute.xlu0 %611
        %613 = vrot.lane.b32.xlu0 %v282, 46
        %v614 = vpop.permute.xlu0 %613
        %vm615 = vcmp.lt.s32.totalorder %v290, 46
        %v616 = vsel %vm615, %v612, %v614
        %v617 = vsel %vm615, %v614, %v612
        %618 = vst [vmem:[#allocation2 + $0x250] sm:$0xff] %v616
        %619 = vst [vmem:[#allocation2 + $0x258] sm:$0xff] %v617
        %620 = vrot.lane.b32.xlu0 %v281, 45
        %v621 = vpop.permute.xlu0 %620
        %622 = vrot.lane.b32.xlu0 %v282, 45
        %v623 = vpop.permute.xlu0 %622
        %vm624 = vcmp.lt.s32.totalorder %v290, 45
        %v625 = vsel %vm624, %v621, %v623
        %v626 = vsel %vm624, %v623, %v621
        %627 = vst [vmem:[#allocation2 + $0x260] sm:$0xff] %v625
        %628 = vst [vmem:[#allocation2 + $0x268] sm:$0xff] %v626
        %629 = vrot.lane.b32.xlu0 %v281, 44
        %v630 = vpop.permute.xlu0 %629
        %631 = vrot.lane.b32.xlu0 %v282, 44
        %v632 = vpop.permute.xlu0 %631
        %vm633 = vcmp.lt.s32.totalorder %v290, 44
        %v634 = vsel %vm633, %v630, %v632
        %v635 = vsel %vm633, %v632, %v630
        %636 = vst [vmem:[#allocation2 + $0x270] sm:$0xff] %v634
        %637 = vst [vmem:[#allocation2 + $0x278] sm:$0xff] %v635
        %638 = vrot.lane.b32.xlu0 %v281, 43
        %v639 = vpop.permute.xlu0 %638
        %640 = vrot.lane.b32.xlu0 %v282, 43
        %v641 = vpop.permute.xlu0 %640
        %vm642 = vcmp.lt.s32.totalorder %v290, 43
        %v643 = vsel %vm642, %v639, %v641
        %v644 = vsel %vm642, %v641, %v639
        %645 = vst [vmem:[#allocation2 + $0x280] sm:$0xff] %v643
        %646 = vst [vmem:[#allocation2 + $0x288] sm:$0xff] %v644
        %647 = vrot.lane.b32.xlu0 %v281, 42
        %v648 = vpop.permute.xlu0 %647
        %649 = vrot.lane.b32.xlu0 %v282, 42
        %v650 = vpop.permute.xlu0 %649
        %vm651 = vcmp.lt.s32.totalorder %v290, 42
        %v652 = vsel %vm651, %v648, %v650
        %v653 = vsel %vm651, %v650, %v648
        %654 = vst [vmem:[#allocation2 + $0x290] sm:$0xff] %v652
        %655 = vst [vmem:[#allocation2 + $0x298] sm:$0xff] %v653
        %656 = vrot.lane.b32.xlu0 %v281, 32
        %v657 = vpop.permute.xlu0 %656
        %658 = vrot.lane.b32.xlu0 %v282, 32
        %v659 = vpop.permute.xlu0 %658
        %vm660 = vcmp.lt.s32.totalorder %v290, 32
        %v661 = vsel %vm660, %v657, %v659
        %v662 = vsel %vm660, %v659, %v657
        %663 = vst [vmem:[#allocation2 + $0x2a0] sm:$0xff] %v661
        %664 = vst [vmem:[#allocation2 + $0x2a8] sm:$0xff] %v662
        %665 = vrot.lane.b32.xlu0 %v281, 31
        %v666 = vpop.permute.xlu0 %665
        %667 = vrot.lane.b32.xlu0 %v282, 31
        %v668 = vpop.permute.xlu0 %667
        %vm669 = vcmp.lt.s32.totalorder %v290, 31
        %v670 = vsel %vm669, %v666, %v668
        %v671 = vsel %vm669, %v668, %v666
        %672 = vst [vmem:[#allocation2 + $0x2b0] sm:$0xff] %v670
        %673 = vst [vmem:[#allocation2 + $0x2b8] sm:$0xff] %v671
        %674 = vrot.lane.b32.xlu0 %v281, 30
        %v675 = vpop.permute.xlu0 %674
        %676 = vrot.lane.b32.xlu0 %v282, 30
        %v677 = vpop.permute.xlu0 %676
        %vm678 = vcmp.lt.s32.totalorder %v290, 30
        %v679 = vsel %vm678, %v675, %v677
        %v680 = vsel %vm678, %v677, %v675
        %681 = vst [vmem:[#allocation2 + $0x2c0] sm:$0xff] %v679
        %682 = vst [vmem:[#allocation2 + $0x2c8] sm:$0xff] %v680
        %683 = vrot.lane.b32.xlu0 %v281, 29
        %v684 = vpop.permute.xlu0 %683
        %685 = vrot.lane.b32.xlu0 %v282, 29
        %v686 = vpop.permute.xlu0 %685
        %vm687 = vcmp.lt.s32.totalorder %v290, 29
        %v688 = vsel %vm687, %v684, %v686
        %v689 = vsel %vm687, %v686, %v684
        %690 = vst [vmem:[#allocation2 + $0x2d0] sm:$0xff] %v688
        %691 = vst [vmem:[#allocation2 + $0x2d8] sm:$0xff] %v689
        %692 = vrot.lane.b32.xlu0 %v281, 28
        %v693 = vpop.permute.xlu0 %692
        %694 = vrot.lane.b32.xlu0 %v282, 28
        %v695 = vpop.permute.xlu0 %694
        %vm696 = vcmp.lt.s32.totalorder %v290, 28
        %v697 = vsel %vm696, %v693, %v695
        %v698 = vsel %vm696, %v695, %v693
        %699 = vst [vmem:[#allocation2 + $0x2e0] sm:$0xff] %v697
        %700 = vst [vmem:[#allocation2 + $0x2e8] sm:$0xff] %v698
        %701 = vrot.lane.b32.xlu0 %v281, 27
        %v702 = vpop.permute.xlu0 %701
        %703 = vrot.lane.b32.xlu0 %v282, 27
        %v704 = vpop.permute.xlu0 %703
        %vm705 = vcmp.lt.s32.totalorder %v290, 27
        %v706 = vsel %vm705, %v702, %v704
        %v707 = vsel %vm705, %v704, %v702
        %708 = vst [vmem:[#allocation2 + $0x2f0] sm:$0xff] %v706
        %709 = vst [vmem:[#allocation2 + $0x2f8] sm:$0xff] %v707
        %710 = vrot.lane.b32.xlu0 %v281, 26
        %v711 = vpop.permute.xlu0 %710
        %712 = vrot.lane.b32.xlu0 %v282, 26
        %v713 = vpop.permute.xlu0 %712
        %vm714 = vcmp.lt.s32.totalorder %v290, 26
        %v715 = vsel %vm714, %v711, %v713
        %v716 = vsel %vm714, %v713, %v711
        %717 = vst [vmem:[#allocation2 + $0x300] sm:$0xff] %v715
        %718 = vst [vmem:[#allocation2 + $0x308] sm:$0xff] %v716
        %v719 = vld [vmem:[#allocation7] sm:$0xff]
        %v720 = vld [vmem:[#allocation7 + $0x8] sm:$0xff]
        %v721 = vld [vmem:[#allocation7 + $0x10] sm:$0xff]
        %v722 = vld [vmem:[#allocation7 + $0x18] sm:$0xff]
        %v723 = vld [vmem:[#allocation2] sm:$0xff]
        %v724 = vld [vmem:[#allocation2 + $0x8] sm:$0xff]
        %v725 = vld [vmem:[#allocation2 + $0x10] sm:$0xff]
        %v726 = vld [vmem:[#allocation2 + $0x18] sm:$0xff]
        %v727 = vld [vmem:[#allocation2 + $0x20] sm:$0xff]
        %v728 = vld [vmem:[#allocation2 + $0x28] sm:$0xff]
        %v729 = vld [vmem:[#allocation2 + $0x30] sm:$0xff]
        %v730 = vld [vmem:[#allocation2 + $0x38] sm:$0xff]
        %v731 = vld [vmem:[#allocation2 + $0x40] sm:$0xff]
        %v732 = vld [vmem:[#allocation2 + $0x48] sm:$0xff]
        %v733 = vld [vmem:[#allocation2 + $0x50] sm:$0xff]
        %v734 = vld [vmem:[#allocation2 + $0x58] sm:$0xff]
        %v735 = vld [vmem:[#allocation2 + $0x60] sm:$0xff]
        %v736 = vld [vmem:[#allocation2 + $0x68] sm:$0xff]
        %v737 = vld [vmem:[#allocation2 + $0x70] sm:$0xff]
        %v738 = vld [vmem:[#allocation2 + $0x78] sm:$0xff]
        %v739 = vld [vmem:[#allocation2 + $0x80] sm:$0xff]
        %v740 = vld [vmem:[#allocation2 + $0x88] sm:$0xff]
        %v741 = vld [vmem:[#allocation2 + $0x90] sm:$0xff]
        %v742 = vld [vmem:[#allocation2 + $0x98] sm:$0xff]
        %v743 = vld [vmem:[#allocation2 + $0xa0] sm:$0xff]
        %v744 = vld [vmem:[#allocation2 + $0xa8] sm:$0xff]
        %v745 = vld [vmem:[#allocation2 + $0xb0] sm:$0xff]
        %v746 = vld [vmem:[#allocation2 + $0xb8] sm:$0xff]
        %v747 = vld [vmem:[#allocation2 + $0xc0] sm:$0xff]
        %v748 = vld [vmem:[#allocation2 + $0xc8] sm:$0xff]
        %v749 = vld [vmem:[#allocation2 + $0xd0] sm:$0xff]
        %v750 = vld [vmem:[#allocation2 + $0xd8] sm:$0xff]
        %v751 = vld [vmem:[#allocation2 + $0xe0] sm:$0xff]
        %v752 = vld [vmem:[#allocation2 + $0xe8] sm:$0xff]
        %v753 = vld [vmem:[#allocation2 + $0xf0] sm:$0xff]
        %v754 = vld [vmem:[#allocation2 + $0xf8] sm:$0xff]
        %v755 = vld [vmem:[#allocation2 + $0x100] sm:$0xff]
        %v756 = vld [vmem:[#allocation2 + $0x108] sm:$0xff]
        %v757 = vld [vmem:[#allocation2 + $0x110] sm:$0xff]
        %v758 = vld [vmem:[#allocation2 + $0x118] sm:$0xff]
        %v759 = vld [vmem:[#allocation2 + $0x120] sm:$0xff]
        %v760 = vld [vmem:[#allocation2 + $0x128] sm:$0xff]
        %v761 = vld [vmem:[#allocation2 + $0x130] sm:$0xff]
        %v762 = vld [vmem:[#allocation2 + $0x138] sm:$0xff]
        %v763 = vld [vmem:[#allocation2 + $0x140] sm:$0xff]
        %v764 = vld [vmem:[#allocation2 + $0x148] sm:$0xff]
        %v765 = vld [vmem:[#allocation2 + $0x150] sm:$0xff]
        %v766 = vld [vmem:[#allocation2 + $0x158] sm:$0xff]
        %v767 = vld [vmem:[#allocation2 + $0x160] sm:$0xff]
        %v768 = vld [vmem:[#allocation2 + $0x168] sm:$0xff]
        %v769 = vld [vmem:[#allocation2 + $0x170] sm:$0xff]
        %v770 = vld [vmem:[#allocation2 + $0x178] sm:$0xff]
        %v771 = vld [vmem:[#allocation2 + $0x180] sm:$0xff]
        %v772 = vld [vmem:[#allocation2 + $0x188] sm:$0xff]
        %v773 = vld [vmem:[#allocation2 + $0x190] sm:$0xff]
        %v774 = vld [vmem:[#allocation2 + $0x198] sm:$0xff]
        %v775 = vld [vmem:[#allocation2 + $0x1a0] sm:$0xff]
        %v776 = vld [vmem:[#allocation2 + $0x1a8] sm:$0xff]
        %v777 = vld [vmem:[#allocation2 + $0x1b0] sm:$0xff]
        %v778 = vld [vmem:[#allocation2 + $0x1b8] sm:$0xff]
        %v779 = vld [vmem:[#allocation2 + $0x1c0] sm:$0xff]
        %v780 = vld [vmem:[#allocation2 + $0x1c8] sm:$0xff]
        %v781 = vld [vmem:[#allocation2 + $0x1d0] sm:$0xff]
        %v782 = vld [vmem:[#allocation2 + $0x1d8] sm:$0xff]
        %v783 = vld [vmem:[#allocation2 + $0x1e0] sm:$0xff]
        %v784 = vld [vmem:[#allocation2 + $0x1e8] sm:$0xff]
        %v785 = vld [vmem:[#allocation2 + $0x1f0] sm:$0xff]
        %v786 = vld [vmem:[#allocation2 + $0x1f8] sm:$0xff]
        %v787 = vld [vmem:[#allocation2 + $0x200] sm:$0xff]
        %v788 = vld [vmem:[#allocation2 + $0x208] sm:$0xff]
        %v789 = vld [vmem:[#allocation2 + $0x210] sm:$0xff]
        %v790 = vld [vmem:[#allocation2 + $0x218] sm:$0xff]
        %v791 = vld [vmem:[#allocation2 + $0x220] sm:$0xff]
        %v792 = vld [vmem:[#allocation2 + $0x228] sm:$0xff]
        %v793 = vld [vmem:[#allocation2 + $0x230] sm:$0xff]
        %v794 = vld [vmem:[#allocation2 + $0x238] sm:$0xff]
        %v795 = vld [vmem:[#allocation2 + $0x240] sm:$0xff]
        %v796 = vld [vmem:[#allocation2 + $0x248] sm:$0xff]
        %v797 = vld [vmem:[#allocation2 + $0x250] sm:$0xff]
        %v798 = vld [vmem:[#allocation2 + $0x258] sm:$0xff]
        %v799 = vld [vmem:[#allocation2 + $0x260] sm:$0xff]
        %v800 = vld [vmem:[#allocation2 + $0x268] sm:$0xff]
        %v801 = vld [vmem:[#allocation2 + $0x270] sm:$0xff]
        %v802 = vld [vmem:[#allocation2 + $0x278] sm:$0xff]
        %v803 = vld [vmem:[#allocation2 + $0x280] sm:$0xff]
        %v804 = vld [vmem:[#allocation2 + $0x288] sm:$0xff]
        %v805 = vld [vmem:[#allocation2 + $0x290] sm:$0xff]
        %v806 = vld [vmem:[#allocation2 + $0x298] sm:$0xff]
        %v807 = vld [vmem:[#allocation2 + $0x2a0] sm:$0xff]
        %v808 = vld [vmem:[#allocation2 + $0x2a8] sm:$0xff]
        %v809 = vld [vmem:[#allocation2 + $0x2b0] sm:$0xff]
        %v810 = vld [vmem:[#allocation2 + $0x2b8] sm:$0xff]
        %v811 = vld [vmem:[#allocation2 + $0x2c0] sm:$0xff]
        %v812 = vld [vmem:[#allocation2 + $0x2c8] sm:$0xff]
        %v813 = vld [vmem:[#allocation2 + $0x2d0] sm:$0xff]
        %v814 = vld [vmem:[#allocation2 + $0x2d8] sm:$0xff]
        %v815 = vld [vmem:[#allocation2 + $0x2e0] sm:$0xff]
        %v816 = vld [vmem:[#allocation2 + $0x2e8] sm:$0xff]
        %v817 = vld [vmem:[#allocation2 + $0x2f0] sm:$0xff]
        %v818 = vld [vmem:[#allocation2 + $0x2f8] sm:$0xff]
        %v819 = vld [vmem:[#allocation2 + $0x300] sm:$0xff]
        %v820 = vld [vmem:[#allocation2 + $0x308] sm:$0xff]
        %v821 = vld [vmem:[#allocation2 + $0x310] sm:$0xff]
        %v822 = vld [vmem:[#allocation2 + $0x318] sm:$0xff]
        %vm823 = vcmask 130048
        %v825 = vsel %vm823, %v722, 0
        %827 = vmatpush.msra.mxu0 %v753
        %828 = vmatpush.msra.mxu0 %v751
        %829 = vmatpush.msra.mxu0 %v749
        %830 = vmatpush.msra.mxu0 %v747
        %831 = vmatpush.msra.mxu0 %v745
        %832 = vmatpush.msra.mxu0 %v743
        %833 = vmatpush.msra.mxu0 %v741
        %834 = vmatpush.msra.mxu0 %v739
        %835 = vmatpush.msra.mxu0 %v737
        %836 = vmatpush.msra.mxu0 %v735
        %837 = vmatpush.msra.mxu0 %v733
        %838 = vmatpush.msra.mxu0 %v731
        %839 = vmatpush.msra.mxu0 %v729
        %840 = vmatpush.msra.mxu0 %v727
        %841 = vmatpush.msra.mxu0 %v725
        %842 = vmatpush.msra.mxu0 %v723
        %843 = vmatmul.f32.gmra.mxu0 %v719
        %v844 = vpop.f32.mrf.mxu0
        %v845 = vadd.f32 0.0, %v844
        %846 = vdwg.mxu0
        %847 = vmatpush.msra.mxu0 %v785
        %848 = vmatpush.msra.mxu0 %v783
        %849 = vmatpush.msra.mxu0 %v781
        %850 = vmatpush.msra.mxu0 %v779
        %851 = vmatpush.msra.mxu0 %v777
        %852 = vmatpush.msra.mxu0 %v775
        %853 = vmatpush.msra.mxu0 %v773
        %854 = vmatpush.msra.mxu0 %v771
        %855 = vmatpush.msra.mxu0 %v769
        %856 = vmatpush.msra.mxu0 %v767
        %857 = vmatpush.msra.mxu0 %v765
        %858 = vmatpush.msra.mxu0 %v763
        %859 = vmatpush.msra.mxu0 %v761
        %860 = vmatpush.msra.mxu0 %v759
        %861 = vmatpush.msra.mxu0 %v757
        %862 = vmatpush.msra.mxu0 %v755
        %863 = vmatmul.f32.gmra.mxu0 %v720
        %v864 = vpop.f32.mrf.mxu0
        %v865 = vadd.f32 %v845, %v864
        %866 = vdwg.mxu0
        %867 = vmatpush.msra.mxu0 %v817
        %868 = vmatpush.msra.mxu0 %v815
        %869 = vmatpush.msra.mxu0 %v813
        %870 = vmatpush.msra.mxu0 %v811
        %871 = vmatpush.msra.mxu0 %v809
        %872 = vmatpush.msra.mxu0 %v807
        %873 = vmatpush.msra.mxu0 %v805
        %874 = vmatpush.msra.mxu0 %v803
        %875 = vmatpush.msra.mxu0 %v801
        %876 = vmatpush.msra.mxu0 %v799
        %877 = vmatpush.msra.mxu0 %v797
        %878 = vmatpush.msra.mxu0 %v795
        %879 = vmatpush.msra.mxu0 %v793
        %880 = vmatpush.msra.mxu0 %v791
        %881 = vmatpush.msra.mxu0 %v789
        %882 = vmatpush.msra.mxu0 %v787
        %883 = vmatmul.f32.gmra.mxu0 %v721
        %v884 = vpop.f32.mrf.mxu0
        %v885 = vadd.f32 %v865, %v884
        %886 = vdwg.mxu0
        %887 = vmatpush.msra.mxu0 0.0
        %888 = vmatpush.msra.mxu0 0.0
        %889 = vmatpush.msra.mxu0 0.0
        %890 = vmatpush.msra.mxu0 0.0
        %891 = vmatpush.msra.mxu0 0.0
        %892 = vmatpush.msra.mxu0 0.0
        %893 = vmatpush.msra.mxu0 0.0
        %894 = vmatpush.msra.mxu0 0.0
        %895 = vmatpush.msra.mxu0 0.0
        %896 = vmatpush.msra.mxu0 0.0
        %897 = vmatpush.msra.mxu0 0.0
        %898 = vmatpush.msra.mxu0 0.0
        %899 = vmatpush.msra.mxu0 0.0
        %900 = vmatpush.msra.mxu0 0.0
        %901 = vmatpush.msra.mxu0 %v821
        %902 = vmatpush.msra.mxu0 %v819
        %903 = vmatmul.f32.gmra.mxu0 %v825
        %v904 = vpop.f32.mrf.mxu0
        %v905 = vadd.f32 %v885, %v904
        %906 = vdwg.mxu0
        %907 = vmatpush.msra.mxu0 %v754
        %908 = vmatpush.msra.mxu0 %v752
        %909 = vmatpush.msra.mxu0 %v750
        %910 = vmatpush.msra.mxu0 %v748
        %911 = vmatpush.msra.mxu0 %v746
        %912 = vmatpush.msra.mxu0 %v744
        %913 = vmatpush.msra.mxu0 %v742
        %914 = vmatpush.msra.mxu0 %v740
        %915 = vmatpush.msra.mxu0 %v738
        %916 = vmatpush.msra.mxu0 %v736
        %917 = vmatpush.msra.mxu0 %v734
        %918 = vmatpush.msra.mxu0 %v732
        %919 = vmatpush.msra.mxu0 %v730
        %920 = vmatpush.msra.mxu0 %v728
        %921 = vmatpush.msra.mxu0 %v726
        %922 = vmatpush.msra.mxu0 %v724
        %923 = vmatmul.f32.gmra.mxu0 %v719
        %v924 = vpop.f32.mrf.mxu0
        %v925 = vadd.f32 0.0, %v924
        %926 = vdwg.mxu0
        %927 = vmatpush.msra.mxu0 %v786
        %928 = vmatpush.msra.mxu0 %v784
        %929 = vmatpush.msra.mxu0 %v782
        %930 = vmatpush.msra.mxu0 %v780
        %931 = vmatpush.msra.mxu0 %v778
        %932 = vmatpush.msra.mxu0 %v776
        %933 = vmatpush.msra.mxu0 %v774
        %934 = vmatpush.msra.mxu0 %v772
        %935 = vmatpush.msra.mxu0 %v770
        %936 = vmatpush.msra.mxu0 %v768
        %937 = vmatpush.msra.mxu0 %v766
        %938 = vmatpush.msra.mxu0 %v764
        %939 = vmatpush.msra.mxu0 %v762
        %940 = vmatpush.msra.mxu0 %v760
        %941 = vmatpush.msra.mxu0 %v758
        %942 = vmatpush.msra.mxu0 %v756
        %943 = vmatmul.f32.gmra.mxu0 %v720
        %v944 = vpop.f32.mrf.mxu0
        %v945 = vadd.f32 %v925, %v944
        %946 = vdwg.mxu0
        %947 = vmatpush.msra.mxu0 %v818
        %948 = vmatpush.msra.mxu0 %v816
        %949 = vmatpush.msra.mxu0 %v814
        %950 = vmatpush.msra.mxu0 %v812
        %951 = vmatpush.msra.mxu0 %v810
        %952 = vmatpush.msra.mxu0 %v808
        %953 = vmatpush.msra.mxu0 %v806
        %954 = vmatpush.msra.mxu0 %v804
        %955 = vmatpush.msra.mxu0 %v802
        %956 = vmatpush.msra.mxu0 %v800
        %957 = vmatpush.msra.mxu0 %v798
        %958 = vmatpush.msra.mxu0 %v796
        %959 = vmatpush.msra.mxu0 %v794
        %960 = vmatpush.msra.mxu0 %v792
        %961 = vmatpush.msra.mxu0 %v790
        %962 = vmatpush.msra.mxu0 %v788
        %963 = vmatmul.f32.gmra.mxu0 %v721
        %v964 = vpop.f32.mrf.mxu0
        %v965 = vadd.f32 %v945, %v964
        %966 = vdwg.mxu0
        %967 = vmatpush.msra.mxu0 0.0
        %968 = vmatpush.msra.mxu0 0.0
        %969 = vmatpush.msra.mxu0 0.0
        %970 = vmatpush.msra.mxu0 0.0
        %971 = vmatpush.msra.mxu0 0.0
        %972 = vmatpush.msra.mxu0 0.0
        %973 = vmatpush.msra.mxu0 0.0
        %974 = vmatpush.msra.mxu0 0.0
        %975 = vmatpush.msra.mxu0 0.0
        %976 = vmatpush.msra.mxu0 0.0
        %977 = vmatpush.msra.mxu0 0.0
        %978 = vmatpush.msra.mxu0 0.0
        %979 = vmatpush.msra.mxu0 0.0
        %980 = vmatpush.msra.mxu0 0.0
        %981 = vmatpush.msra.mxu0 %v822
        %982 = vmatpush.msra.mxu0 %v820
        %983 = vmatmul.f32.gmra.mxu0 %v825
        %v984 = vpop.f32.mrf.mxu0
        %v985 = vadd.f32 %v965, %v984
        %986 = vdwg.mxu0
        %vm987 = vcmp.ge.f32.partialorder %v905, 0.0
        %vm988 = vcmp.ge.f32.partialorder %v985, 0.0
        %v989 = vstv %s273
        %v990 = vmul.f32 %v905, %v989
        %v991 = vmul.f32 %v985, %v989
        %v992 = vsel %vm987, %v905, %v990
        %v993 = vsel %vm988, %v985, %v991
        %v995 = vperm.slane %v274, 0
        %v996 = vperm.slane %v274, 1
        %v999 = vmul.f32 %v992, %v995
        %v1000 = vmul.f32 %v993, %v996
        %1001 = vrot.lane.b32.xlu0 %v999, 102
        %v1002 = vpop.permute.xlu0 %1001
        %1003 = vrot.lane.b32.xlu0 %v1000, 102
        %v1004 = vpop.permute.xlu0 %1003
        %vm1005 = vcmp.lt.s32.totalorder %v290, 102
        %v1006 = vsel %vm1005, %v1002, %v1004
        %v1007 = vsel %vm1005, %v1004, %v1002
        %1008 = vst [vmem:[#allocation2] sm:$0xff] %v1007
        %1009 = vst [vmem:[#allocation2 + $0x8] sm:$0xff] %v1006
        %1010 = vrot.lane.b32.xlu0 %v999, 101
        %v1011 = vpop.permute.xlu0 %1010
        %1012 = vrot.lane.b32.xlu0 %v1000, 101
        %v1013 = vpop.permute.xlu0 %1012
        %vm1014 = vcmp.lt.s32.totalorder %v290, 101
        %v1015 = vsel %vm1014, %v1011, %v1013
        %v1016 = vsel %vm1014, %v1013, %v1011
        %1017 = vst [vmem:[#allocation2 + $0x10] sm:$0xff] %v1016
        %1018 = vst [vmem:[#allocation2 + $0x18] sm:$0xff] %v1015
        %1019 = vrot.lane.b32.xlu0 %v999, 100
        %v1020 = vpop.permute.xlu0 %1019
        %1021 = vrot.lane.b32.xlu0 %v1000, 100
        %v1022 = vpop.permute.xlu0 %1021
        %vm1023 = vcmp.lt.s32.totalorder %v290, 100
        %v1024 = vsel %vm1023, %v1020, %v1022
        %v1025 = vsel %vm1023, %v1022, %v1020
        %1026 = vst [vmem:[#allocation2 + $0x20] sm:$0xff] %v1025
        %1027 = vst [vmem:[#allocation2 + $0x28] sm:$0xff] %v1024
        %1028 = vrot.lane.b32.xlu0 %v999, 99
        %v1029 = vpop.permute.xlu0 %1028
        %1030 = vrot.lane.b32.xlu0 %v1000, 99
        %v1031 = vpop.permute.xlu0 %1030
        %vm1032 = vcmp.lt.s32.totalorder %v290, 99
        %v1033 = vsel %vm1032, %v1029, %v1031
        %v1034 = vsel %vm1032, %v1031, %v1029
        %1035 = vst [vmem:[#allocation2 + $0x30] sm:$0xff] %v1034
        %1036 = vst [vmem:[#allocation2 + $0x38] sm:$0xff] %v1033
        %1037 = vrot.lane.b32.xlu0 %v999, 98
        %v1038 = vpop.permute.xlu0 %1037
        %1039 = vrot.lane.b32.xlu0 %v1000, 98
        %v1040 = vpop.permute.xlu0 %1039
        %vm1041 = vcmp.lt.s32.totalorder %v290, 98
        %v1042 = vsel %vm1041, %v1038, %v1040
        %v1043 = vsel %vm1041, %v1040, %v1038
        %1044 = vst [vmem:[#allocation2 + $0x40] sm:$0xff] %v1043
        %1045 = vst [vmem:[#allocation2 + $0x48] sm:$0xff] %v1042
        %1046 = vrot.lane.b32.xlu0 %v999, 97
        %v1047 = vpop.permute.xlu0 %1046
        %1048 = vrot.lane.b32.xlu0 %v1000, 97
        %v1049 = vpop.permute.xlu0 %1048
        %vm1050 = vcmp.lt.s32.totalorder %v290, 97
        %v1051 = vsel %vm1050, %v1047, %v1049
        %v1052 = vsel %vm1050, %v1049, %v1047
        %1053 = vst [vmem:[#allocation2 + $0x50] sm:$0xff] %v1052
        %1054 = vst [vmem:[#allocation2 + $0x58] sm:$0xff] %v1051
        %1055 = vrot.lane.b32.xlu0 %v999, 96
        %v1056 = vpop.permute.xlu0 %1055
        %1057 = vrot.lane.b32.xlu0 %v1000, 96
        %v1058 = vpop.permute.xlu0 %1057
        %v1059 = vsel %vm408, %v1056, %v1058
        %v1060 = vsel %vm408, %v1058, %v1056
        %1061 = vst [vmem:[#allocation2 + $0x60] sm:$0xff] %v1060
        %1062 = vst [vmem:[#allocation2 + $0x68] sm:$0xff] %v1059
        %1063 = vrot.lane.b32.xlu0 %v999, 86
        %v1064 = vpop.permute.xlu0 %1063
        %1065 = vrot.lane.b32.xlu0 %v1000, 86
        %v1066 = vpop.permute.xlu0 %1065
        %vm1067 = vcmp.lt.s32.totalorder %v290, 86
        %v1068 = vsel %vm1067, %v1064, %v1066
        %v1069 = vsel %vm1067, %v1066, %v1064
        %1070 = vst [vmem:[#allocation2 + $0x70] sm:$0xff] %v1069
        %1071 = vst [vmem:[#allocation2 + $0x78] sm:$0xff] %v1068
        %1072 = vrot.lane.b32.xlu0 %v999, 85
        %v1073 = vpop.permute.xlu0 %1072
        %1074 = vrot.lane.b32.xlu0 %v1000, 85
        %v1075 = vpop.permute.xlu0 %1074
        %vm1076 = vcmp.lt.s32.totalorder %v290, 85
        %v1077 = vsel %vm1076, %v1073, %v1075
        %v1078 = vsel %vm1076, %v1075, %v1073
        %1079 = vst [vmem:[#allocation2 + $0x80] sm:$0xff] %v1078
        %1080 = vst [vmem:[#allocation2 + $0x88] sm:$0xff] %v1077
        %1081 = vrot.lane.b32.xlu0 %v999, 84
        %v1082 = vpop.permute.xlu0 %1081
        %1083 = vrot.lane.b32.xlu0 %v1000, 84
        %v1084 = vpop.permute.xlu0 %1083
        %vm1085 = vcmp.lt.s32.totalorder %v290, 84
        %v1086 = vsel %vm1085, %v1082, %v1084
        %v1087 = vsel %vm1085, %v1084, %v1082
        %1088 = vst [vmem:[#allocation2 + $0x90] sm:$0xff] %v1087
        %1089 = vst [vmem:[#allocation2 + $0x98] sm:$0xff] %v1086
        %1090 = vrot.lane.b32.xlu0 %v999, 83
        %v1091 = vpop.permute.xlu0 %1090
        %1092 = vrot.lane.b32.xlu0 %v1000, 83
        %v1093 = vpop.permute.xlu0 %1092
        %vm1094 = vcmp.lt.s32.totalorder %v290, 83
        %v1095 = vsel %vm1094, %v1091, %v1093
        %v1096 = vsel %vm1094, %v1093, %v1091
        %1097 = vst [vmem:[#allocation2 + $0xa0] sm:$0xff] %v1096
        %1098 = vst [vmem:[#allocation2 + $0xa8] sm:$0xff] %v1095
        %1099 = vrot.lane.b32.xlu0 %v999, 82
        %v1100 = vpop.permute.xlu0 %1099
        %1101 = vrot.lane.b32.xlu0 %v1000, 82
        %v1102 = vpop.permute.xlu0 %1101
        %vm1103 = vcmp.lt.s32.totalorder %v290, 82
        %v1104 = vsel %vm1103, %v1100, %v1102
        %v1105 = vsel %vm1103, %v1102, %v1100
        %1106 = vst [vmem:[#allocation2 + $0xb0] sm:$0xff] %v1105
        %1107 = vst [vmem:[#allocation2 + $0xb8] sm:$0xff] %v1104
        %1108 = vrot.lane.b32.xlu0 %v999, 81
        %v1109 = vpop.permute.xlu0 %1108
        %1110 = vrot.lane.b32.xlu0 %v1000, 81
        %v1111 = vpop.permute.xlu0 %1110
        %vm1112 = vcmp.lt.s32.totalorder %v290, 81
        %v1113 = vsel %vm1112, %v1109, %v1111
        %v1114 = vsel %vm1112, %v1111, %v1109
        %1115 = vst [vmem:[#allocation2 + $0xc0] sm:$0xff] %v1114
        %1116 = vst [vmem:[#allocation2 + $0xc8] sm:$0xff] %v1113
        %1117 = vrot.lane.b32.xlu0 %v999, 80
        %v1118 = vpop.permute.xlu0 %1117
        %1119 = vrot.lane.b32.xlu0 %v1000, 80
        %v1120 = vpop.permute.xlu0 %1119
        %v1121 = vsel %vm471, %v1118, %v1120
        %v1122 = vsel %vm471, %v1120, %v1118
        %1123 = vst [vmem:[#allocation2 + $0xd0] sm:$0xff] %v1122
        %1124 = vst [vmem:[#allocation2 + $0xd8] sm:$0xff] %v1121
        %1125 = vrot.lane.b32.xlu0 %v999, 70
        %v1126 = vpop.permute.xlu0 %1125
        %1127 = vrot.lane.b32.xlu0 %v1000, 70
        %v1128 = vpop.permute.xlu0 %1127
        %vm1129 = vcmp.lt.s32.totalorder %v290, 70
        %v1130 = vsel %vm1129, %v1126, %v1128
        %v1131 = vsel %vm1129, %v1128, %v1126
        %1132 = vst [vmem:[#allocation2 + $0xe0] sm:$0xff] %v1131
        %1133 = vst [vmem:[#allocation2 + $0xe8] sm:$0xff] %v1130
        %1134 = vrot.lane.b32.xlu0 %v999, 69
        %v1135 = vpop.permute.xlu0 %1134
        %1136 = vrot.lane.b32.xlu0 %v1000, 69
        %v1137 = vpop.permute.xlu0 %1136
        %vm1138 = vcmp.lt.s32.totalorder %v290, 69
        %v1139 = vsel %vm1138, %v1135, %v1137
        %v1140 = vsel %vm1138, %v1137, %v1135
        %1141 = vst [vmem:[#allocation2 + $0xf0] sm:$0xff] %v1140
        %1142 = vst [vmem:[#allocation2 + $0xf8] sm:$0xff] %v1139
        %1143 = vrot.lane.b32.xlu0 %v999, 68
        %v1144 = vpop.permute.xlu0 %1143
        %1145 = vrot.lane.b32.xlu0 %v1000, 68
        %v1146 = vpop.permute.xlu0 %1145
        %vm1147 = vcmp.lt.s32.totalorder %v290, 68
        %v1148 = vsel %vm1147, %v1144, %v1146
        %v1149 = vsel %vm1147, %v1146, %v1144
        %1150 = vst [vmem:[#allocation2 + $0x100] sm:$0xff] %v1149
        %1151 = vst [vmem:[#allocation2 + $0x108] sm:$0xff] %v1148
        %1152 = vrot.lane.b32.xlu0 %v999, 67
        %v1153 = vpop.permute.xlu0 %1152
        %1154 = vrot.lane.b32.xlu0 %v1000, 67
        %v1155 = vpop.permute.xlu0 %1154
        %vm1156 = vcmp.lt.s32.totalorder %v290, 67
        %v1157 = vsel %vm1156, %v1153, %v1155
        %v1158 = vsel %vm1156, %v1155, %v1153
        %1159 = vst [vmem:[#allocation2 + $0x110] sm:$0xff] %v1158
        %1160 = vst [vmem:[#allocation2 + $0x118] sm:$0xff] %v1157
        %1161 = vrot.lane.b32.xlu0 %v999, 66
        %v1162 = vpop.permute.xlu0 %1161
        %1163 = vrot.lane.b32.xlu0 %v1000, 66
        %v1164 = vpop.permute.xlu0 %1163
        %vm1165 = vcmp.lt.s32.totalorder %v290, 66
        %v1166 = vsel %vm1165, %v1162, %v1164
        %v1167 = vsel %vm1165, %v1164, %v1162
        %1168 = vst [vmem:[#allocation2 + $0x120] sm:$0xff] %v1167
        %1169 = vst [vmem:[#allocation2 + $0x128] sm:$0xff] %v1166
        %1170 = vrot.lane.b32.xlu0 %v999, 65
        %v1171 = vpop.permute.xlu0 %1170
        %1172 = vrot.lane.b32.xlu0 %v1000, 65
        %v1173 = vpop.permute.xlu0 %1172
        %vm1174 = vcmp.lt.s32.totalorder %v290, 65
        %v1175 = vsel %vm1174, %v1171, %v1173
        %v1176 = vsel %vm1174, %v1173, %v1171
        %1177 = vst [vmem:[#allocation2 + $0x130] sm:$0xff] %v1176
        %1178 = vst [vmem:[#allocation2 + $0x138] sm:$0xff] %v1175
        %1179 = vrot.lane.b32.xlu0 %v999, 64
        %v1180 = vpop.permute.xlu0 %1179
        %1181 = vrot.lane.b32.xlu0 %v1000, 64
        %v1182 = vpop.permute.xlu0 %1181
        %v1183 = vsel %vm534, %v1180, %v1182
        %v1184 = vsel %vm534, %v1182, %v1180
        %1185 = vst [vmem:[#allocation2 + $0x140] sm:$0xff] %v1184
        %1186 = vst [vmem:[#allocation2 + $0x148] sm:$0xff] %v1183
        %1187 = vrot.lane.b32.xlu0 %v999, 54
        %v1188 = vpop.permute.xlu0 %1187
        %1189 = vrot.lane.b32.xlu0 %v1000, 54
        %v1190 = vpop.permute.xlu0 %1189
        %vm1191 = vcmp.lt.s32.totalorder %v290, 54
        %v1192 = vsel %vm1191, %v1188, %v1190
        %v1193 = vsel %vm1191, %v1190, %v1188
        %1194 = vst [vmem:[#allocation2 + $0x150] sm:$0xff] %v1193
        %1195 = vst [vmem:[#allocation2 + $0x158] sm:$0xff] %v1192
        %1196 = vrot.lane.b32.xlu0 %v999, 53
        %v1197 = vpop.permute.xlu0 %1196
        %1198 = vrot.lane.b32.xlu0 %v1000, 53
        %v1199 = vpop.permute.xlu0 %1198
        %vm1200 = vcmp.lt.s32.totalorder %v290, 53
        %v1201 = vsel %vm1200, %v1197, %v1199
        %v1202 = vsel %vm1200, %v1199, %v1197
        %1203 = vst [vmem:[#allocation2 + $0x160] sm:$0xff] %v1202
        %1204 = vst [vmem:[#allocation2 + $0x168] sm:$0xff] %v1201
        %1205 = vrot.lane.b32.xlu0 %v999, 52
        %v1206 = vpop.permute.xlu0 %1205
        %1207 = vrot.lane.b32.xlu0 %v1000, 52
        %v1208 = vpop.permute.xlu0 %1207
        %vm1209 = vcmp.lt.s32.totalorder %v290, 52
        %v1210 = vsel %vm1209, %v1206, %v1208
        %v1211 = vsel %vm1209, %v1208, %v1206
        %1212 = vst [vmem:[#allocation2 + $0x170] sm:$0xff] %v1211
        %1213 = vst [vmem:[#allocation2 + $0x178] sm:$0xff] %v1210
        %1214 = vrot.lane.b32.xlu0 %v999, 51
        %v1215 = vpop.permute.xlu0 %1214
        %1216 = vrot.lane.b32.xlu0 %v1000, 51
        %v1217 = vpop.permute.xlu0 %1216
        %vm1218 = vcmp.lt.s32.totalorder %v290, 51
        %v1219 = vsel %vm1218, %v1215, %v1217
        %v1220 = vsel %vm1218, %v1217, %v1215
        %1221 = vst [vmem:[#allocation2 + $0x180] sm:$0xff] %v1220
        %1222 = vst [vmem:[#allocation2 + $0x188] sm:$0xff] %v1219
        %1223 = vrot.lane.b32.xlu0 %v999, 50
        %v1224 = vpop.permute.xlu0 %1223
        %1225 = vrot.lane.b32.xlu0 %v1000, 50
        %v1226 = vpop.permute.xlu0 %1225
        %vm1227 = vcmp.lt.s32.totalorder %v290, 50
        %v1228 = vsel %vm1227, %v1224, %v1226
        %v1229 = vsel %vm1227, %v1226, %v1224
        %1230 = vst [vmem:[#allocation2 + $0x190] sm:$0xff] %v1229
        %1231 = vst [vmem:[#allocation2 + $0x198] sm:$0xff] %v1228
        %1232 = vrot.lane.b32.xlu0 %v999, 49
        %v1233 = vpop.permute.xlu0 %1232
        %1234 = vrot.lane.b32.xlu0 %v1000, 49
        %v1235 = vpop.permute.xlu0 %1234
        %vm1236 = vcmp.lt.s32.totalorder %v290, 49
        %v1237 = vsel %vm1236, %v1233, %v1235
        %v1238 = vsel %vm1236, %v1235, %v1233
        %1239 = vst [vmem:[#allocation2 + $0x1a0] sm:$0xff] %v1238
        %1240 = vst [vmem:[#allocation2 + $0x1a8] sm:$0xff] %v1237
        %1241 = vrot.lane.b32.xlu0 %v999, 48
        %v1242 = vpop.permute.xlu0 %1241
        %1243 = vrot.lane.b32.xlu0 %v1000, 48
        %v1244 = vpop.permute.xlu0 %1243
        %v1245 = vsel %vm597, %v1242, %v1244
        %v1246 = vsel %vm597, %v1244, %v1242
        %1247 = vst [vmem:[#allocation2 + $0x1b0] sm:$0xff] %v1246
        %1248 = vst [vmem:[#allocation2 + $0x1b8] sm:$0xff] %v1245
        %1249 = vrot.lane.b32.xlu0 %v999, 38
        %v1250 = vpop.permute.xlu0 %1249
        %1251 = vrot.lane.b32.xlu0 %v1000, 38
        %v1252 = vpop.permute.xlu0 %1251
        %vm1253 = vcmp.lt.s32.totalorder %v290, 38
        %v1254 = vsel %vm1253, %v1250, %v1252
        %v1255 = vsel %vm1253, %v1252, %v1250
        %1256 = vst [vmem:[#allocation2 + $0x1c0] sm:$0xff] %v1255
        %1257 = vst [vmem:[#allocation2 + $0x1c8] sm:$0xff] %v1254
        %1258 = vrot.lane.b32.xlu0 %v999, 37
        %v1259 = vpop.permute.xlu0 %1258
        %1260 = vrot.lane.b32.xlu0 %v1000, 37
        %v1261 = vpop.permute.xlu0 %1260
        %vm1262 = vcmp.lt.s32.totalorder %v290, 37
        %v1263 = vsel %vm1262, %v1259, %v1261
        %v1264 = vsel %vm1262, %v1261, %v1259
        %1265 = vst [vmem:[#allocation2 + $0x1d0] sm:$0xff] %v1264
        %1266 = vst [vmem:[#allocation2 + $0x1d8] sm:$0xff] %v1263
        %1267 = vrot.lane.b32.xlu0 %v999, 36
        %v1268 = vpop.permute.xlu0 %1267
        %1269 = vrot.lane.b32.xlu0 %v1000, 36
        %v1270 = vpop.permute.xlu0 %1269
        %vm1271 = vcmp.lt.s32.totalorder %v290, 36
        %v1272 = vsel %vm1271, %v1268, %v1270
        %v1273 = vsel %vm1271, %v1270, %v1268
        %1274 = vst [vmem:[#allocation2 + $0x1e0] sm:$0xff] %v1273
        %1275 = vst [vmem:[#allocation2 + $0x1e8] sm:$0xff] %v1272
        %1276 = vrot.lane.b32.xlu0 %v999, 35
        %v1277 = vpop.permute.xlu0 %1276
        %1278 = vrot.lane.b32.xlu0 %v1000, 35
        %v1279 = vpop.permute.xlu0 %1278
        %vm1280 = vcmp.lt.s32.totalorder %v290, 35
        %v1281 = vsel %vm1280, %v1277, %v1279
        %v1282 = vsel %vm1280, %v1279, %v1277
        %1283 = vst [vmem:[#allocation2 + $0x1f0] sm:$0xff] %v1282
        %1284 = vst [vmem:[#allocation2 + $0x1f8] sm:$0xff] %v1281
        %1285 = vrot.lane.b32.xlu0 %v999, 34
        %v1286 = vpop.permute.xlu0 %1285
        %1287 = vrot.lane.b32.xlu0 %v1000, 34
        %v1288 = vpop.permute.xlu0 %1287
        %vm1289 = vcmp.lt.s32.totalorder %v290, 34
        %v1290 = vsel %vm1289, %v1286, %v1288
        %v1291 = vsel %vm1289, %v1288, %v1286
        %1292 = vst [vmem:[#allocation2 + $0x200] sm:$0xff] %v1291
        %1293 = vst [vmem:[#allocation2 + $0x208] sm:$0xff] %v1290
        %1294 = vrot.lane.b32.xlu0 %v999, 33
        %v1295 = vpop.permute.xlu0 %1294
        %1296 = vrot.lane.b32.xlu0 %v1000, 33
        %v1297 = vpop.permute.xlu0 %1296
        %vm1298 = vcmp.lt.s32.totalorder %v290, 33
        %v1299 = vsel %vm1298, %v1295, %v1297
        %v1300 = vsel %vm1298, %v1297, %v1295
        %1301 = vst [vmem:[#allocation2 + $0x210] sm:$0xff] %v1300
        %1302 = vst [vmem:[#allocation2 + $0x218] sm:$0xff] %v1299
        %1303 = vrot.lane.b32.xlu0 %v999, 32
        %v1304 = vpop.permute.xlu0 %1303
        %1305 = vrot.lane.b32.xlu0 %v1000, 32
        %v1306 = vpop.permute.xlu0 %1305
        %v1307 = vsel %vm660, %v1304, %v1306
        %v1308 = vsel %vm660, %v1306, %v1304
        %1309 = vst [vmem:[#allocation2 + $0x220] sm:$0xff] %v1308
        %1310 = vst [vmem:[#allocation2 + $0x228] sm:$0xff] %v1307
        %1311 = vrot.lane.b32.xlu0 %v999, 22
        %v1312 = vpop.permute.xlu0 %1311
        %1313 = vrot.lane.b32.xlu0 %v1000, 22
        %v1314 = vpop.permute.xlu0 %1313
        %vm1315 = vcmp.lt.s32.totalorder %v290, 22
        %v1316 = vsel %vm1315, %v1312, %v1314
        %v1317 = vsel %vm1315, %v1314, %v1312
        %1318 = vst [vmem:[#allocation2 + $0x230] sm:$0xff] %v1317
        %1319 = vst [vmem:[#allocation2 + $0x238] sm:$0xff] %v1316
        %1320 = vrot.lane.b32.xlu0 %v999, 21
        %v1321 = vpop.permute.xlu0 %1320
        %1322 = vrot.lane.b32.xlu0 %v1000, 21
        %v1323 = vpop.permute.xlu0 %1322
        %vm1324 = vcmp.lt.s32.totalorder %v290, 21
        %v1325 = vsel %vm1324, %v1321, %v1323
        %v1326 = vsel %vm1324, %v1323, %v1321
        %1327 = vst [vmem:[#allocation2 + $0x240] sm:$0xff] %v1326
        %1328 = vst [vmem:[#allocation2 + $0x248] sm:$0xff] %v1325
        %1329 = vrot.lane.b32.xlu0 %v999, 20
        %v1330 = vpop.permute.xlu0 %1329
        %1331 = vrot.lane.b32.xlu0 %v1000, 20
        %v1332 = vpop.permute.xlu0 %1331
        %vm1333 = vcmp.lt.s32.totalorder %v290, 20
        %v1334 = vsel %vm1333, %v1330, %v1332
        %v1335 = vsel %vm1333, %v1332, %v1330
        %1336 = vst [vmem:[#allocation2 + $0x250] sm:$0xff] %v1335
        %1337 = vst [vmem:[#allocation2 + $0x258] sm:$0xff] %v1334
        %1338 = vrot.lane.b32.xlu0 %v999, 19
        %v1339 = vpop.permute.xlu0 %1338
        %1340 = vrot.lane.b32.xlu0 %v1000, 19
        %v1341 = vpop.permute.xlu0 %1340
        %vm1342 = vcmp.lt.s32.totalorder %v290, 19
        %v1343 = vsel %vm1342, %v1339, %v1341
        %v1344 = vsel %vm1342, %v1341, %v1339
        %1345 = vst [vmem:[#allocation2 + $0x260] sm:$0xff] %v1344
        %1346 = vst [vmem:[#allocation2 + $0x268] sm:$0xff] %v1343
        %1347 = vrot.lane.b32.xlu0 %v999, 18
        %v1348 = vpop.permute.xlu0 %1347
        %1349 = vrot.lane.b32.xlu0 %v1000, 18
        %v1350 = vpop.permute.xlu0 %1349
        %vm1351 = vcmp.lt.s32.totalorder %v290, 18
        %v1352 = vsel %vm1351, %v1348, %v1350
        %v1353 = vsel %vm1351, %v1350, %v1348
        %1354 = vst [vmem:[#allocation2 + $0x270] sm:$0xff] %v1353
        %1355 = vst [vmem:[#allocation2 + $0x278] sm:$0xff] %v1352
        %1356 = vrot.lane.b32.xlu0 %v999, 17
        %v1357 = vpop.permute.xlu0 %1356
        %1358 = vrot.lane.b32.xlu0 %v1000, 17
        %v1359 = vpop.permute.xlu0 %1358
        %vm1360 = vcmp.lt.s32.totalorder %v290, 17
        %v1361 = vsel %vm1360, %v1357, %v1359
        %v1362 = vsel %vm1360, %v1359, %v1357
        %1363 = vst [vmem:[#allocation2 + $0x280] sm:$0xff] %v1362
        %1364 = vst [vmem:[#allocation2 + $0x288] sm:$0xff] %v1361
        %1365 = vrot.lane.b32.xlu0 %v999, 16
        %v1366 = vpop.permute.xlu0 %1365
        %1367 = vrot.lane.b32.xlu0 %v1000, 16
        %v1368 = vpop.permute.xlu0 %1367
        %vm1369 = vcmp.lt.s32.totalorder %v290, 16
        %v1370 = vsel %vm1369, %v1366, %v1368
        %v1371 = vsel %vm1369, %v1368, %v1366
        %1372 = vst [vmem:[#allocation2 + $0x290] sm:$0xff] %v1371
        %1373 = vst [vmem:[#allocation2 + $0x298] sm:$0xff] %v1370
        %1374 = vrot.lane.b32.xlu0 %v999, 6
        %v1375 = vpop.permute.xlu0 %1374
        %1376 = vrot.lane.b32.xlu0 %v1000, 6
        %v1377 = vpop.permute.xlu0 %1376
        %vm1378 = vcmp.lt.s32.totalorder %v290, 6
        %v1379 = vsel %vm1378, %v1375, %v1377
        %v1380 = vsel %vm1378, %v1377, %v1375
        %1381 = vst [vmem:[#allocation2 + $0x2a0] sm:$0xff] %v1380
        %1382 = vst [vmem:[#allocation2 + $0x2a8] sm:$0xff] %v1379
        %1383 = vrot.lane.b32.xlu0 %v999, 5
        %v1384 = vpop.permute.xlu0 %1383
        %1385 = vrot.lane.b32.xlu0 %v1000, 5
        %v1386 = vpop.permute.xlu0 %1385
        %vm1387 = vcmp.lt.s32.totalorder %v290, 5
        %v1388 = vsel %vm1387, %v1384, %v1386
        %v1389 = vsel %vm1387, %v1386, %v1384
        %1390 = vst [vmem:[#allocation2 + $0x2b0] sm:$0xff] %v1389
        %1391 = vst [vmem:[#allocation2 + $0x2b8] sm:$0xff] %v1388
        %1392 = vrot.lane.b32.xlu0 %v999, 4
        %v1393 = vpop.permute.xlu0 %1392
        %1394 = vrot.lane.b32.xlu0 %v1000, 4
        %v1395 = vpop.permute.xlu0 %1394
        %vm1396 = vcmp.lt.s32.totalorder %v290, 4
        %v1397 = vsel %vm1396, %v1393, %v1395
        %v1398 = vsel %vm1396, %v1395, %v1393
        %1399 = vst [vmem:[#allocation2 + $0x2c0] sm:$0xff] %v1398
        %1400 = vst [vmem:[#allocation2 + $0x2c8] sm:$0xff] %v1397
        %1401 = vrot.lane.b32.xlu0 %v999, 3
        %v1402 = vpop.permute.xlu0 %1401
        %1403 = vrot.lane.b32.xlu0 %v1000, 3
        %v1404 = vpop.permute.xlu0 %1403
        %vm1405 = vcmp.lt.s32.totalorder %v290, 3
        %v1406 = vsel %vm1405, %v1402, %v1404
        %v1407 = vsel %vm1405, %v1404, %v1402
        %1408 = vst [vmem:[#allocation2 + $0x2d0] sm:$0xff] %v1407
        %1409 = vst [vmem:[#allocation2 + $0x2d8] sm:$0xff] %v1406
        %1410 = vrot.lane.b32.xlu0 %v999, 2
        %v1411 = vpop.permute.xlu0 %1410
        %1412 = vrot.lane.b32.xlu0 %v1000, 2
        %v1413 = vpop.permute.xlu0 %1412
        %vm1414 = vcmp.lt.s32.totalorder %v290, 2
        %v1415 = vsel %vm1414, %v1411, %v1413
        %v1416 = vsel %vm1414, %v1413, %v1411
        %1417 = vst [vmem:[#allocation2 + $0x2e0] sm:$0xff] %v1416
        %1418 = vst [vmem:[#allocation2 + $0x2e8] sm:$0xff] %v1415
        %1419 = vrot.lane.b32.xlu0 %v999, 1
        %v1420 = vpop.permute.xlu0 %1419
        %1421 = vrot.lane.b32.xlu0 %v1000, 1
        %v1422 = vpop.permute.xlu0 %1421
        %vm1423 = vcmp.lt.s32.totalorder %v290, 1
        %v1424 = vsel %vm1423, %v1420, %v1422
        %v1425 = vsel %vm1423, %v1422, %v1420
        %1426 = vst [vmem:[#allocation2 + $0x2f0] sm:$0xff] %v1425
        %1427 = vst [vmem:[#allocation2 + $0x2f8] sm:$0xff] %v1424
        %1428 = vst [vmem:[#allocation2 + $0x300] sm:$0xff] %v999
        %1429 = vst [vmem:[#allocation2 + $0x308] sm:$0xff] %v1000
        %v1430 = vld [vmem:[#allocation9] sm:$0xff]
        %v1431 = vld [vmem:[#allocation9 + $0x8] sm:$0xff]
        %v1432 = vld [vmem:[#allocation9 + $0x10] sm:$0xff]
        %v1433 = vld [vmem:[#allocation9 + $0x18] sm:$0xff]
        %v1434 = vld [vmem:[#allocation2] sm:$0xff]
        %v1435 = vld [vmem:[#allocation2 + $0x8] sm:$0xff]
        %v1436 = vld [vmem:[#allocation2 + $0x10] sm:$0xff]
        %v1437 = vld [vmem:[#allocation2 + $0x18] sm:$0xff]
        %v1438 = vld [vmem:[#allocation2 + $0x20] sm:$0xff]
        %v1439 = vld [vmem:[#allocation2 + $0x28] sm:$0xff]
        %v1440 = vld [vmem:[#allocation2 + $0x30] sm:$0xff]
        %v1441 = vld [vmem:[#allocation2 + $0x38] sm:$0xff]
        %v1442 = vld [vmem:[#allocation2 + $0x40] sm:$0xff]
        %v1443 = vld [vmem:[#allocation2 + $0x48] sm:$0xff]
        %v1444 = vld [vmem:[#allocation2 + $0x50] sm:$0xff]
        %v1445 = vld [vmem:[#allocation2 + $0x58] sm:$0xff]
        %v1446 = vld [vmem:[#allocation2 + $0x60] sm:$0xff]
        %v1447 = vld [vmem:[#allocation2 + $0x68] sm:$0xff]
        %v1448 = vld [vmem:[#allocation2 + $0x70] sm:$0xff]
        %v1449 = vld [vmem:[#allocation2 + $0x78] sm:$0xff]
        %v1450 = vld [vmem:[#allocation2 + $0x80] sm:$0xff]
        %v1451 = vld [vmem:[#allocation2 + $0x88] sm:$0xff]
        %v1452 = vld [vmem:[#allocation2 + $0x90] sm:$0xff]
        %v1453 = vld [vmem:[#allocation2 + $0x98] sm:$0xff]
        %v1454 = vld [vmem:[#allocation2 + $0xa0] sm:$0xff]
        %v1455 = vld [vmem:[#allocation2 + $0xa8] sm:$0xff]
        %v1456 = vld [vmem:[#allocation2 + $0xb0] sm:$0xff]
        %v1457 = vld [vmem:[#allocation2 + $0xb8] sm:$0xff]
        %v1458 = vld [vmem:[#allocation2 + $0xc0] sm:$0xff]
        %v1459 = vld [vmem:[#allocation2 + $0xc8] sm:$0xff]
        %v1460 = vld [vmem:[#allocation2 + $0xd0] sm:$0xff]
        %v1461 = vld [vmem:[#allocation2 + $0xd8] sm:$0xff]
        %v1462 = vld [vmem:[#allocation2 + $0xe0] sm:$0xff]
        %v1463 = vld [vmem:[#allocation2 + $0xe8] sm:$0xff]
        %v1464 = vld [vmem:[#allocation2 + $0xf0] sm:$0xff]
        %v1465 = vld [vmem:[#allocation2 + $0xf8] sm:$0xff]
        %v1466 = vld [vmem:[#allocation2 + $0x100] sm:$0xff]
        %v1467 = vld [vmem:[#allocation2 + $0x108] sm:$0xff]
        %v1468 = vld [vmem:[#allocation2 + $0x110] sm:$0xff]
        %v1469 = vld [vmem:[#allocation2 + $0x118] sm:$0xff]
        %v1470 = vld [vmem:[#allocation2 + $0x120] sm:$0xff]
        %v1471 = vld [vmem:[#allocation2 + $0x128] sm:$0xff]
        %v1472 = vld [vmem:[#allocation2 + $0x130] sm:$0xff]
        %v1473 = vld [vmem:[#allocation2 + $0x138] sm:$0xff]
        %v1474 = vld [vmem:[#allocation2 + $0x140] sm:$0xff]
        %v1475 = vld [vmem:[#allocation2 + $0x148] sm:$0xff]
        %v1476 = vld [vmem:[#allocation2 + $0x150] sm:$0xff]
        %v1477 = vld [vmem:[#allocation2 + $0x158] sm:$0xff]
        %v1478 = vld [vmem:[#allocation2 + $0x160] sm:$0xff]
        %v1479 = vld [vmem:[#allocation2 + $0x168] sm:$0xff]
        %v1480 = vld [vmem:[#allocation2 + $0x170] sm:$0xff]
        %v1481 = vld [vmem:[#allocation2 + $0x178] sm:$0xff]
        %v1482 = vld [vmem:[#allocation2 + $0x180] sm:$0xff]
        %v1483 = vld [vmem:[#allocation2 + $0x188] sm:$0xff]
        %v1484 = vld [vmem:[#allocation2 + $0x190] sm:$0xff]
        %v1485 = vld [vmem:[#allocation2 + $0x198] sm:$0xff]
        %v1486 = vld [vmem:[#allocation2 + $0x1a0] sm:$0xff]
        %v1487 = vld [vmem:[#allocation2 + $0x1a8] sm:$0xff]
        %v1488 = vld [vmem:[#allocation2 + $0x1b0] sm:$0xff]
        %v1489 = vld [vmem:[#allocation2 + $0x1b8] sm:$0xff]
        %v1490 = vld [vmem:[#allocation2 + $0x1c0] sm:$0xff]
        %v1491 = vld [vmem:[#allocation2 + $0x1c8] sm:$0xff]
        %v1492 = vld [vmem:[#allocation2 + $0x1d0] sm:$0xff]
        %v1493 = vld [vmem:[#allocation2 + $0x1d8] sm:$0xff]
        %v1494 = vld [vmem:[#allocation2 + $0x1e0] sm:$0xff]
        %v1495 = vld [vmem:[#allocation2 + $0x1e8] sm:$0xff]
        %v1496 = vld [vmem:[#allocation2 + $0x1f0] sm:$0xff]
        %v1497 = vld [vmem:[#allocation2 + $0x1f8] sm:$0xff]
        %v1498 = vld [vmem:[#allocation2 + $0x200] sm:$0xff]
        %v1499 = vld [vmem:[#allocation2 + $0x208] sm:$0xff]
        %v1500 = vld [vmem:[#allocation2 + $0x210] sm:$0xff]
        %v1501 = vld [vmem:[#allocation2 + $0x218] sm:$0xff]
        %v1502 = vld [vmem:[#allocation2 + $0x220] sm:$0xff]
        %v1503 = vld [vmem:[#allocation2 + $0x228] sm:$0xff]
        %v1504 = vld [vmem:[#allocation2 + $0x230] sm:$0xff]
        %v1505 = vld [vmem:[#allocation2 + $0x238] sm:$0xff]
        %v1506 = vld [vmem:[#allocation2 + $0x240] sm:$0xff]
        %v1507 = vld [vmem:[#allocation2 + $0x248] sm:$0xff]
        %v1508 = vld [vmem:[#allocation2 + $0x250] sm:$0xff]
        %v1509 = vld [vmem:[#allocation2 + $0x258] sm:$0xff]
        %v1510 = vld [vmem:[#allocation2 + $0x260] sm:$0xff]
        %v1511 = vld [vmem:[#allocation2 + $0x268] sm:$0xff]
        %v1512 = vld [vmem:[#allocation2 + $0x270] sm:$0xff]
        %v1513 = vld [vmem:[#allocation2 + $0x278] sm:$0xff]
        %v1514 = vld [vmem:[#allocation2 + $0x280] sm:$0xff]
        %v1515 = vld [vmem:[#allocation2 + $0x288] sm:$0xff]
        %v1516 = vld [vmem:[#allocation2 + $0x290] sm:$0xff]
        %v1517 = vld [vmem:[#allocation2 + $0x298] sm:$0xff]
        %v1518 = vld [vmem:[#allocation2 + $0x2a0] sm:$0xff]
        %v1519 = vld [vmem:[#allocation2 + $0x2a8] sm:$0xff]
        %v1520 = vld [vmem:[#allocation2 + $0x2b0] sm:$0xff]
        %v1521 = vld [vmem:[#allocation2 + $0x2b8] sm:$0xff]
        %v1522 = vld [vmem:[#allocation2 + $0x2c0] sm:$0xff]
        %v1523 = vld [vmem:[#allocation2 + $0x2c8] sm:$0xff]
        %v1524 = vld [vmem:[#allocation2 + $0x2d0] sm:$0xff]
        %v1525 = vld [vmem:[#allocation2 + $0x2d8] sm:$0xff]
        %v1526 = vld [vmem:[#allocation2 + $0x2e0] sm:$0xff]
        %v1527 = vld [vmem:[#allocation2 + $0x2e8] sm:$0xff]
        %v1528 = vld [vmem:[#allocation2 + $0x2f0] sm:$0xff]
        %v1529 = vld [vmem:[#allocation2 + $0x2f8] sm:$0xff]
        %v1530 = vld [vmem:[#allocation2 + $0x300] sm:$0xff]
        %v1531 = vld [vmem:[#allocation2 + $0x308] sm:$0xff]
        %v1532 = vld [vmem:[#allocation2 + $0x310] sm:$0xff]
        %v1533 = vld [vmem:[#allocation2 + $0x318] sm:$0xff]
        %v1535 = vsel %vm823, %v1433, 0
        %1537 = vmatpush.msra.mxu0 %v1464
        %1538 = vmatpush.msra.mxu0 %v1462
        %1539 = vmatpush.msra.mxu0 %v1460
        %1540 = vmatpush.msra.mxu0 %v1458
        %1541 = vmatpush.msra.mxu0 %v1456
        %1542 = vmatpush.msra.mxu0 %v1454
        %1543 = vmatpush.msra.mxu0 %v1452
        %1544 = vmatpush.msra.mxu0 %v1450
        %1545 = vmatpush.msra.mxu0 %v1448
        %1546 = vmatpush.msra.mxu0 %v1446
        %1547 = vmatpush.msra.mxu0 %v1444
        %1548 = vmatpush.msra.mxu0 %v1442
        %1549 = vmatpush.msra.mxu0 %v1440
        %1550 = vmatpush.msra.mxu0 %v1438
        %1551 = vmatpush.msra.mxu0 %v1436
        %1552 = vmatpush.msra.mxu0 %v1434
        %1553 = vmatmul.f32.gmra.mxu0 %v1430
        %v1554 = vpop.f32.mrf.mxu0
        %v1555 = vadd.f32 0.0, %v1554
        %1556 = vdwg.mxu0
        %1557 = vmatpush.msra.mxu0 %v1496
        %1558 = vmatpush.msra.mxu0 %v1494
        %1559 = vmatpush.msra.mxu0 %v1492
        %1560 = vmatpush.msra.mxu0 %v1490
        %1561 = vmatpush.msra.mxu0 %v1488
        %1562 = vmatpush.msra.mxu0 %v1486
        %1563 = vmatpush.msra.mxu0 %v1484
        %1564 = vmatpush.msra.mxu0 %v1482
        %1565 = vmatpush.msra.mxu0 %v1480
        %1566 = vmatpush.msra.mxu0 %v1478
        %1567 = vmatpush.msra.mxu0 %v1476
        %1568 = vmatpush.msra.mxu0 %v1474
        %1569 = vmatpush.msra.mxu0 %v1472
        %1570 = vmatpush.msra.mxu0 %v1470
        %1571 = vmatpush.msra.mxu0 %v1468
        %1572 = vmatpush.msra.mxu0 %v1466
        %1573 = vmatmul.f32.gmra.mxu0 %v1431
        %v1574 = vpop.f32.mrf.mxu0
        %v1575 = vadd.f32 %v1555, %v1574
        %1576 = vdwg.mxu0
        %1577 = vmatpush.msra.mxu0 %v1528
        %1578 = vmatpush.msra.mxu0 %v1526
        %1579 = vmatpush.msra.mxu0 %v1524
        %1580 = vmatpush.msra.mxu0 %v1522
        %1581 = vmatpush.msra.mxu0 %v1520
        %1582 = vmatpush.msra.mxu0 %v1518
        %1583 = vmatpush.msra.mxu0 %v1516
        %1584 = vmatpush.msra.mxu0 %v1514
        %1585 = vmatpush.msra.mxu0 %v1512
        %1586 = vmatpush.msra.mxu0 %v1510
        %1587 = vmatpush.msra.mxu0 %v1508
        %1588 = vmatpush.msra.mxu0 %v1506
        %1589 = vmatpush.msra.mxu0 %v1504
        %1590 = vmatpush.msra.mxu0 %v1502
        %1591 = vmatpush.msra.mxu0 %v1500
        %1592 = vmatpush.msra.mxu0 %v1498
        %1593 = vmatmul.f32.gmra.mxu0 %v1432
        %v1594 = vpop.f32.mrf.mxu0
        %v1595 = vadd.f32 %v1575, %v1594
        %1596 = vdwg.mxu0
        %1597 = vmatpush.msra.mxu0 0.0
        %1598 = vmatpush.msra.mxu0 0.0
        %1599 = vmatpush.msra.mxu0 0.0
        %1600 = vmatpush.msra.mxu0 0.0
        %1601 = vmatpush.msra.mxu0 0.0
        %1602 = vmatpush.msra.mxu0 0.0
        %1603 = vmatpush.msra.mxu0 0.0
        %1604 = vmatpush.msra.mxu0 0.0
        %1605 = vmatpush.msra.mxu0 0.0
        %1606 = vmatpush.msra.mxu0 0.0
        %1607 = vmatpush.msra.mxu0 0.0
        %1608 = vmatpush.msra.mxu0 0.0
        %1609 = vmatpush.msra.mxu0 0.0
        %1610 = vmatpush.msra.mxu0 0.0
        %1611 = vmatpush.msra.mxu0 %v1532
        %1612 = vmatpush.msra.mxu0 %v1530
        %1613 = vmatmul.f32.gmra.mxu0 %v1535
        %v1614 = vpop.f32.mrf.mxu0
        %v1615 = vadd.f32 %v1595, %v1614
        %1616 = vdwg.mxu0
        %1617 = vmatpush.msra.mxu0 %v1465
        %1618 = vmatpush.msra.mxu0 %v1463
        %1619 = vmatpush.msra.mxu0 %v1461
        %1620 = vmatpush.msra.mxu0 %v1459
        %1621 = vmatpush.msra.mxu0 %v1457
        %1622 = vmatpush.msra.mxu0 %v1455
        %1623 = vmatpush.msra.mxu0 %v1453
        %1624 = vmatpush.msra.mxu0 %v1451
        %1625 = vmatpush.msra.mxu0 %v1449
        %1626 = vmatpush.msra.mxu0 %v1447
        %1627 = vmatpush.msra.mxu0 %v1445
        %1628 = vmatpush.msra.mxu0 %v1443
        %1629 = vmatpush.msra.mxu0 %v1441
        %1630 = vmatpush.msra.mxu0 %v1439
        %1631 = vmatpush.msra.mxu0 %v1437
        %1632 = vmatpush.msra.mxu0 %v1435
        %1633 = vmatmul.f32.gmra.mxu0 %v1430
        %v1634 = vpop.f32.mrf.mxu0
        %v1635 = vadd.f32 0.0, %v1634
        %1636 = vdwg.mxu0
        %1637 = vmatpush.msra.mxu0 %v1497
        %1638 = vmatpush.msra.mxu0 %v1495
        %1639 = vmatpush.msra.mxu0 %v1493
        %1640 = vmatpush.msra.mxu0 %v1491
        %1641 = vmatpush.msra.mxu0 %v1489
        %1642 = vmatpush.msra.mxu0 %v1487
        %1643 = vmatpush.msra.mxu0 %v1485
        %1644 = vmatpush.msra.mxu0 %v1483
        %1645 = vmatpush.msra.mxu0 %v1481
        %1646 = vmatpush.msra.mxu0 %v1479
        %1647 = vmatpush.msra.mxu0 %v1477
        %1648 = vmatpush.msra.mxu0 %v1475
        %1649 = vmatpush.msra.mxu0 %v1473
        %1650 = vmatpush.msra.mxu0 %v1471
        %1651 = vmatpush.msra.mxu0 %v1469
        %1652 = vmatpush.msra.mxu0 %v1467
        %1653 = vmatmul.f32.gmra.mxu0 %v1431
        %v1654 = vpop.f32.mrf.mxu0
        %v1655 = vadd.f32 %v1635, %v1654
        %1656 = vdwg.mxu0
        %1657 = vmatpush.msra.mxu0 %v1529
        %1658 = vmatpush.msra.mxu0 %v1527
        %1659 = vmatpush.msra.mxu0 %v1525
        %1660 = vmatpush.msra.mxu0 %v1523
        %1661 = vmatpush.msra.mxu0 %v1521
        %1662 = vmatpush.msra.mxu0 %v1519
        %1663 = vmatpush.msra.mxu0 %v1517
        %1664 = vmatpush.msra.mxu0 %v1515
        %1665 = vmatpush.msra.mxu0 %v1513
        %1666 = vmatpush.msra.mxu0 %v1511
        %1667 = vmatpush.msra.mxu0 %v1509
        %1668 = vmatpush.msra.mxu0 %v1507
        %1669 = vmatpush.msra.mxu0 %v1505
        %1670 = vmatpush.msra.mxu0 %v1503
        %1671 = vmatpush.msra.mxu0 %v1501
        %1672 = vmatpush.msra.mxu0 %v1499
        %1673 = vmatmul.f32.gmra.mxu0 %v1432
        %v1674 = vpop.f32.mrf.mxu0
        %v1675 = vadd.f32 %v1655, %v1674
        %1676 = vdwg.mxu0
        %1677 = vmatpush.msra.mxu0 0.0
        %1678 = vmatpush.msra.mxu0 0.0
        %1679 = vmatpush.msra.mxu0 0.0
        %1680 = vmatpush.msra.mxu0 0.0
        %1681 = vmatpush.msra.mxu0 0.0
        %1682 = vmatpush.msra.mxu0 0.0
        %1683 = vmatpush.msra.mxu0 0.0
        %1684 = vmatpush.msra.mxu0 0.0
        %1685 = vmatpush.msra.mxu0 0.0
        %1686 = vmatpush.msra.mxu0 0.0
        %1687 = vmatpush.msra.mxu0 0.0
        %1688 = vmatpush.msra.mxu0 0.0
        %1689 = vmatpush.msra.mxu0 0.0
        %1690 = vmatpush.msra.mxu0 0.0
        %1691 = vmatpush.msra.mxu0 %v1533
        %1692 = vmatpush.msra.mxu0 %v1531
        %1693 = vmatmul.f32.gmra.mxu0 %v1535
        %v1694 = vpop.f32.mrf.mxu0
        %v1695 = vadd.f32 %v1675, %v1694
        %1696 = vdwg.mxu0
        %v1697 = vsub.f32 %v281, %v1615
        %v1698 = vsub.f32 %v282, %v1695
        %1699 = vst [vmem:[%s272] sm:$0xff] %v1697
        %1700 = vst [vmem:[%s272 + $0x8] sm:$0xff] %v1698
        %s1701 = sand.u32 %s142, 1
        %s1702 = scalar_lea.sflag [#allocation6], %s1701
        %s1703 = sand.u32 %s142, 1
        %s1704 = smul.addr %s1703, 16
        %s1705 = scalar_lea.vmem [#allocation10], %s1704
        // Predicated region
        $region53: #{tpu_custom_call.1} parent=39 // pred_check
          %p1706 = pneg %p152
        $region54: #{tpu_custom_call.1} parent=39 // pred_check_branch
          %1708 = sbr.rel (%p1706) target = $region56
        $region55: #{tpu_custom_call.1} parent=39 // pred_region
          %1710 = vsyncadd %s1702, 0
          %s1711 = smul.addr %s24, 2
          %s1712 = smul.addr %s1711, 8
          %s1713 = scalar_lea.hbm %s5, %s1712
          %s1715 = sshll.u32 %s1705, 4
          %s1716 = int_to_ptr.vmem [resolvable:$true] %s1715
          %s1717 = sshll.u32 %s1713, 4
          %s1718 = int_to_ptr.hbm [resolvable:$true] %s1717
          %1720 = dma.vmem_to_hbm [thread:$0]  %s1716, 256, %s1718, %s1702
        $region56: #{tpu_custom_call.1} parent=39 // pred_fallthru
          _
      $region40: #{tpu_custom_call.1} parent=5 // pred_fallthru
        _
      %p1721 = scmp.le.s32.totalorder 2, %s19
      // Predicated region
      $region57: #{tpu_custom_call.1} parent=5 // pred_check
        %p1722 = pneg %p1721
      $region58: #{tpu_custom_call.1} parent=5 // pred_check_branch
        %1724 = sbr.rel (%p1722) target = $region60
      $region59: #{tpu_custom_call.1} parent=5 // pred_region
        %s1725 = ssub.s32 %s19, 2
        // Predicated region
        $region61: #{tpu_custom_call.1} parent=59 // pred_check
          %p1726 = pneg %p158
        $region62: #{tpu_custom_call.1} parent=59 // pred_check_branch
          %1728 = sbr.rel (%p1726) target = $region64
        $region63: #{tpu_custom_call.1} parent=59 // pred_region
          %s1729 = sand.u32 %s143, 1
          %s1730 = scalar_lea.sflag [#allocation6], %s1729
          %s1731 = sand.u32 %s143, 1
          %s1732 = smul.addr %s1731, 16
          %s1733 = scalar_lea.vmem [#allocation10], %s1732
          %1735 = dma.done %s1730, 256
        $region64: #{tpu_custom_call.1} parent=59 // pred_fallthru
          _
      $region60: #{tpu_custom_call.1} parent=5 // pred_fallthru
        _
    $region6: #{tpu_custom_call.1} parent=1 // loop_footer
      %s23 = sadd.s32 1, %s19
    $region7: #{tpu_custom_call.1} parent=1 // loop_footer_branch
      %18 = sbr.rel target = $region3
    $region8: #{tpu_custom_call.1} parent=1 // loop_exit
      _
    %1736 = vsyncpa [#allocation5], 1
    %s1737 = scalar_lea.sflag [#allocation5], 1
    %1738 = vsyncpa %s1737, 1
    %1739 = vsyncpa [#allocation8], 1
    %1740 = vsyncpa [#allocation6], 1
    %s1741 = scalar_lea.sflag [#allocation6], 1
    %1742 = vsyncpa %s1741, 1

</llo_original>
